<compile_context>
chip_gen: v5e
topology: v5e:2x2
jax: 0.10.0
libtpu: 0.0.40
codegen_flags: <defaults>
</compile_context>

<pallas_src>
import functools

import numpy as np
import jax
import jax.numpy as jnp
from jax.experimental import pallas as pl
from jax.experimental.pallas import tpu as pltpu

EPS = 1e-5
_VMEM_LIMIT = 48 * 1024 * 1024   # safe on v7x (64 MiB physical); raise on v5e/v6e.


def _round_up(x, m):
    return ((x + m - 1) // m) * m


# --------------------------- capability probe --------------------------------


@functools.lru_cache(maxsize=None)
def _in_kernel_transpose_ok(in_dim, out_dim, tn):
    """True iff Mosaic lowers the two 2-D f32 transposes used by the fused path."""
    def k(a_ref, b_ref, at_ref, bt_ref):
        at_ref[...] = jnp.transpose(a_ref[...])      # (tn, in)  -> (in, tn)
        bt_ref[...] = jnp.transpose(b_ref[...])      # (out, tn) -> (tn, out)

    try:
        a = np.arange(tn * in_dim, dtype=np.float32).reshape(tn, in_dim)
        b = np.arange(out_dim * tn, dtype=np.float32).reshape(out_dim, tn)
        at, bt = pl.pallas_call(
            k,
            out_shape=(jax.ShapeDtypeStruct((in_dim, tn), jnp.float32),
                       jax.ShapeDtypeStruct((tn, out_dim), jnp.float32)),
        )(a, b)
        at, bt = jax.block_until_ready((at, bt))
        return bool(np.array_equal(np.asarray(at), a.T)
                    and np.array_equal(np.asarray(bt), b.T))
    except Exception:
        return False


# ------------------------------- kernels ------------------------------------


def _pass1_fused_kernel(h_ref, w1_ref, xt_ref, sum_ref, sumsq_ref, *, n, tn, ragged):
    """Cast/transpose one h tile -> lane-dense bf16 x^T tile; stats of z1 = W1 @ x^T."""
    i = pl.program_id(0)

    @pl.when(i == 0)
    def _():
        sum_ref[...] = jnp.zeros_like(sum_ref)
        sumsq_ref[...] = jnp.zeros_like(sumsq_ref)

    xt = jnp.transpose(h_ref[...]).astype(jnp.bfloat16)            # (in, tn)
    if ragged:
        # Zero padded node columns (stale data from the clipped edge-block DMA)
        # so they contribute exactly 0 to the BN1 statistics and to passes 2-3.
        col = jax.lax.broadcasted_iota(jnp.int32, (1, tn), 1)
        xt = jnp.where(col < n - i * tn, xt, 0)
    xt_ref[...] = xt
    z1 = jnp.dot(w1_ref[...], xt, preferred_element_type=jnp.float32)
    sum_ref[...] += jnp.sum(z1, axis=1, keepdims=True)
    sumsq_ref[...] += jnp.sum(z1 * z1, axis=1, keepdims=True)


def _pass1_kernel(xt_ref, w1_ref, sum_ref, sumsq_ref, *, n, tn, ragged):
    """Fallback pass 1: x^T already built by XLA; accumulate BN1 statistics."""
    i = pl.program_id(0)

    @pl.when(i == 0)
    def _():
        sum_ref[...] = jnp.zeros_like(sum_ref)
        sumsq_ref[...] = jnp.zeros_like(sumsq_ref)

    xt = xt_ref[...]
    if ragged:
        col = jax.lax.broadcasted_iota(jnp.int32, (1, tn), 1)
        xt = jnp.where(col < n - i * tn, xt, 0)
    z1 = jnp.dot(w1_ref[...], xt, preferred_element_type=jnp.float32)
    sum_ref[...] += jnp.sum(z1, axis=1, keepdims=True)
    sumsq_ref[...] += jnp.sum(z1 * z1, axis=1, keepdims=True)


def _pass2_kernel(xt_ref, w1_ref, s1_ref, t1_ref, w2_ref, sum_ref, sumsq_ref,
                  *, n, tn, ragged):
    """Recompute z1, apply BN1 + ReLU, z2 = W2 @ h1; accumulate BN2 statistics."""
    i = pl.program_id(0)

    @pl.when(i == 0)
    def _():
        sum_ref[...] = jnp.zeros_like(sum_ref)
        sumsq_ref[...] = jnp.zeros_like(sumsq_ref)

    z1 = jnp.dot(w1_ref[...], xt_ref[...], preferred_element_type=jnp.float32)
    h1 = jnp.maximum(z1 * s1_ref[...] + t1_ref[...], 0.0)
    z2 = jnp.dot(w2_ref[...], h1.astype(jnp.bfloat16),
                 preferred_element_type=jnp.float32)
    if ragged:
        # Padded node columns are nonzero after BN1's shift -> mask them out.
        col = jax.lax.broadcasted_iota(jnp.int32, (1, tn), 1)
        z2 = jnp.where(col < n - i * tn, z2, 0.0)
    sum_ref[...] += jnp.sum(z2, axis=1, keepdims=True)
    sumsq_ref[...] += jnp.sum(z2 * z2, axis=1, keepdims=True)


def _pass3_fused_kernel(xt_ref, w1_ref, s1_ref, t1_ref, w2_ref, s2_ref, t2_ref, o_ref):
    """Full forward for one tile; transpose in-kernel and store (tile, out_dim)."""
    z1 = jnp.dot(w1_ref[...], xt_ref[...], preferred_element_type=jnp.float32)
    h1 = jnp.maximum(z1 * s1_ref[...] + t1_ref[...], 0.0)
    z2 = jnp.dot(w2_ref[...], h1.astype(jnp.bfloat16),
                 preferred_element_type=jnp.float32)
    y = jnp.maximum(z2 * s2_ref[...] + t2_ref[...], 0.0)          # (out, tn)
    o_ref[...] = jnp.transpose(y)                                  # (tn, out)


def _pass3_kernel(xt_ref, w1_ref, s1_ref, t1_ref, w2_ref, s2_ref, t2_ref, o_ref):
    """Fallback pass 3: store feature-major (out_dim, tile); wrapper transposes."""
    z1 = jnp.dot(w1_ref[...], xt_ref[...], preferred_element_type=jnp.float32)
    h1 = jnp.maximum(z1 * s1_ref[...] + t1_ref[...], 0.0)
    z2 = jnp.dot(w2_ref[...], h1.astype(jnp.bfloat16),
                 preferred_element_type=jnp.float32)
    o_ref[...] = jnp.maximum(z2 * s2_ref[...] + t2_ref[...], 0.0)


# ------------------------------- wrapper ------------------------------------


def apply_nodes(h, params, *, tile_n=8192, fuse_transposes=None):
    """ApplyNodes forward. h: (N, in_dim) float32. Returns {'h': (N, out_dim)}."""
    n, in_dim = h.shape
    hidden_dim, w_in = params["w1"].shape          # PyTorch layout (out, in)
    out_dim = params["w2"].shape[0]
    assert w_in == in_dim

    # Node tile (lane axis, multiple of 128).  Padding is decoupled from the
    # tile: ragged last tiles use clipped edge-block DMAs + in-kernel masks.
    tn = _round_up(min(tile_n, _round_up(n, 128)), 128)
    num_tiles = pl.cdiv(n, tn)
    ragged = (n % tn) != 0

    if fuse_transposes is None:
        fuse_transposes = _in_kernel_transpose_ok(in_dim, out_dim, tn)

    w1 = params["w1"].astype(jnp.bfloat16)                     # (hidden, in)
    w2 = params["w2"].astype(jnp.bfloat16)                     # (out, hidden)
    g1 = params["g1"][:, None].astype(jnp.float32)             # (hidden, 1)
    be1 = params["be1"][:, None].astype(jnp.float32)
    g2 = params["g2"][:, None].astype(jnp.float32)             # (out, 1)
    be2 = params["be2"][:, None].astype(jnp.float32)
    # Note: Linear biases b1/b2 are intentionally NOT fed to the kernels:
    # they cancel exactly under the training-mode BatchNorm that follows, and
    # dropping them keeps zero-padded node columns at exactly z1 = 0.

    xt_spec = pl.BlockSpec((in_dim, tn), lambda i: (0, i))
    w1_spec = pl.BlockSpec((hidden_dim, in_dim), lambda i: (0, 0))
    w2_spec = pl.BlockSpec((out_dim, hidden_dim), lambda i: (0, 0))
    vh_spec = pl.BlockSpec((hidden_dim, 1), lambda i: (0, 0))
    vo_spec = pl.BlockSpec((out_dim, 1), lambda i: (0, 0))

    reduce_params = pltpu.CompilerParams(
        dimension_semantics=("arbitrary",), vmem_limit_bytes=_VMEM_LIMIT)
    parallel_params = pltpu.CompilerParams(
        dimension_semantics=("parallel",), vmem_limit_bytes=_VMEM_LIMIT)

    inv_n = jnp.float32(1.0 / n)
    kargs = dict(n=n, tn=tn, ragged=ragged)

    # ---- Pass 1: batch statistics of z1 = W1 @ x^T (BN1). ----
    if fuse_transposes:
        # Reads h directly (no wrapper transpose/cast/pad) and emits the
        # lane-dense bf16 x^T consumed by passes 2-3.
        h_spec = pl.BlockSpec((tn, in_dim), lambda i: (i, 0))
        xt, sum1, sumsq1 = pl.pallas_call(
            functools.partial(_pass1_fused_kernel, **kargs),
            grid=(num_tiles,),
            in_specs=[h_spec, w1_spec],
            out_specs=(xt_spec, vh_spec, vh_spec),
            out_shape=(jax.ShapeDtypeStruct((in_dim, num_tiles * tn), jnp.bfloat16),
                       jax.ShapeDtypeStruct((hidden_dim, 1), jnp.float32),
                       jax.ShapeDtypeStruct((hidden_dim, 1), jnp.float32)),
            compiler_params=reduce_params,
        )(h, w1)
    else:
        # Fallback (validated path): XLA builds the lane-dense bf16 x^T.
        xt = jnp.transpose(h).astype(jnp.bfloat16)             # (in, N)
        sum1, sumsq1 = pl.pallas_call(
            functools.partial(_pass1_kernel, **kargs),
            grid=(num_tiles,),
            in_specs=[xt_spec, w1_spec],
            out_specs=(vh_spec, vh_spec),
            out_shape=(jax.ShapeDtypeStruct((hidden_dim, 1), jnp.float32),
                       jax.ShapeDtypeStruct((hidden_dim, 1), jnp.float32)),
            compiler_params=reduce_params,
        )(xt, w1)

    mean1 = sum1 * inv_n
    # E[z^2]-E[z]^2 (clamped) is accurate enough at the 1e-2 tolerance used here.
    var1 = jnp.maximum(sumsq1 * inv_n - mean1 * mean1, 0.0)
    scale1 = g1 * jax.lax.rsqrt(var1 + EPS)                   # folded BN1 affine
    shift1 = be1 - mean1 * scale1

    # ---- Pass 2: batch statistics of z2 = W2 @ relu(BN1(z1)) (BN2). ----
    sum2, sumsq2 = pl.pallas_call(
        functools.partial(_pass2_kernel, **kargs),
        grid=(num_tiles,),
        in_specs=[xt_spec, w1_spec, vh_spec, vh_spec, w2_spec],
        out_specs=(vo_spec, vo_spec),
        out_shape=(jax.ShapeDtypeStruct((out_dim, 1), jnp.float32),
                   jax.ShapeDtypeStruct((out_dim, 1), jnp.float32)),
        compiler_params=reduce_params,
    )(xt, w1, scale1, shift1, w2)

    mean2 = sum2 * inv_n
    var2 = jnp.maximum(sumsq2 * inv_n - mean2 * mean2, 0.0)
    scale2 = g2 * jax.lax.rsqrt(var2 + EPS)
    shift2 = be2 - mean2 * scale2

    # ---- Pass 3: apply BN2 + ReLU, stream the output. ----
    if fuse_transposes:
        out = pl.pallas_call(
            _pass3_fused_kernel,
            grid=(num_tiles,),
            in_specs=[xt_spec, w1_spec, vh_spec, vh_spec, w2_spec, vo_spec, vo_spec],
            out_specs=pl.BlockSpec((tn, out_dim), lambda i: (i, 0)),
            out_shape=jax.ShapeDtypeStruct((n, out_dim), jnp.float32),
            compiler_params=parallel_params,
        )(xt, w1, scale1, shift1, w2, scale2, shift2)
    else:
        out_t = pl.pallas_call(
            _pass3_kernel,
            grid=(num_tiles,),
            in_specs=[xt_spec, w1_spec, vh_spec, vh_spec, w2_spec, vo_spec, vo_spec],
            out_specs=pl.BlockSpec((out_dim, tn), lambda i: (0, i)),
            out_shape=jax.ShapeDtypeStruct((out_dim, n), jnp.float32),
            compiler_params=parallel_params,
        )(xt, w1, scale1, shift1, w2, scale2, shift2)
        out = jnp.transpose(out_t)

    return {"h": out}


# --------------------------- params & reference ------------------------------


def init_params(key, in_dim, hidden_dim, out_dim):
    """PyTorch-default init; weights stored in PyTorch (out_features, in_features) layout."""
    k1, k2, k3, k4 = jax.random.split(key, 4)
    s1 = 1.0 / (in_dim ** 0.5)
    s2 = 1.0 / (hidden_dim ** 0.5)
    return {
        "w1": jax.random.uniform(k1, (hidden_dim, in_dim), jnp.float32, -s1, s1),
        "b1": jax.random.uniform(k2, (hidden_dim,), jnp.float32, -s1, s1),
        "g1": jnp.ones((hidden_dim,), jnp.float32),
        "be1": jnp.zeros((hidden_dim,), jnp.float32),
        "w2": jax.random.uniform(k3, (out_dim, hidden_dim), jnp.float32, -s2, s2),
        "b2": jax.random.uniform(k4, (out_dim,), jnp.float32, -s2, s2),
        "g2": jnp.ones((out_dim,), jnp.float32),
        "be2": jnp.zeros((out_dim,), jnp.float32),
    }


def reference(h, p):
    """Pure-JAX reference with full PyTorch module semantics (Linear biases
    included, training-mode BatchNorm1d with biased variance).  Matmul
    operands are rounded to bfloat16 at the same points as the kernel so the
    comparison isolates kernel correctness from standard bf16 rounding."""
    f32 = jnp.float32
    x = h.astype(jnp.bfloat16).astype(f32)
    w1 = p["w1"].astype(jnp.bfloat16).astype(f32)
    w2 = p["w2"].astype(jnp.bfloat16).astype(f32)

    def bn(z, g, b):
        m = jnp.mean(z, axis=0, keepdims=True)
        v = jnp.mean((z - m) ** 2, axis=0, keepdims=True)
        return (z - m) * jax.lax.rsqrt(v + EPS) * g + b

    z1 = x @ w1.T + p["b1"]                       # nn.Linear: x @ W.T + b
    h1 = jnp.maximum(bn(z1, p["g1"], p["be1"]), 0.0)
    h1 = h1.astype(jnp.bfloat16).astype(f32)
    z2 = h1 @ w2.T + p["b2"]
    return jnp.maximum(bn(z2, p["g2"], p["be2"]), 0.0)


if __name__ == "__main__":
    N, IN_DIM, HIDDEN_DIM, OUT_DIM = 1000, 16, 32, 16

    key = jax.random.PRNGKey(0)
    k_feat, k_param = jax.random.split(key)
    h_nodes = jax.random.normal(k_feat, (N, IN_DIM), jnp.float32)
    params = init_params(k_param, IN_DIM, HIDDEN_DIM, OUT_DIM)

    ref = reference(h_nodes, params)

    # tile_n=256 exercises multi-tile accumulation + ragged last-tile masking;
    # the fuse_transposes=False run validates the wrapper-transpose fallback;
    # the final run uses the default (perf) tiling.
    configs = (
        dict(tile_n=256),                        # auto: fused path if supported
        dict(tile_n=256, fuse_transposes=False), # explicit fallback path
        dict(),                                  # default tiling
    )
    for cfg in configs:
        fwd = jax.jit(functools.partial(apply_nodes, **cfg))
        out = jax.block_until_ready(fwd(h_nodes, params)["h"])
        assert out.shape == (N, OUT_DIM)
        err = float(jnp.max(jnp.abs(out - ref)))
        assert jnp.allclose(out, ref, atol=1e-2, rtol=1e-2), (cfg, err)

    print("KERNEL_OK")
</pallas_src>

<mosaic_0001>
module attributes {stable_mosaic.version = 11 : i64} {
  func.func @_pass2_kernel(%arg0: i32, %arg1: memref<16x256xbf16, #tpu.memory_space<vmem>>, %arg2: memref<32x16xbf16, #tpu.memory_space<vmem>>, %arg3: memref<32x1xf32, #tpu.memory_space<vmem>>, %arg4: memref<32x1xf32, #tpu.memory_space<vmem>>, %arg5: memref<16x32xbf16, #tpu.memory_space<vmem>>, %arg6: memref<16x1xf32, #tpu.memory_space<vmem>>, %arg7: memref<16x1xf32, #tpu.memory_space<vmem>>) attributes {dimension_semantics = [#tpu.dimension_semantics<arbitrary>], iteration_bounds = array<i64: 4>, scalar_prefetch = 0 : i64, scratch_operands = 0 : i64, tpu.core_type = #tpu.core_type<tc>, window_params = [{transform_indices = @transform_0, window_bounds = array<i64: 16, 256>}, {pipeline_mode = #tpu.pipeline_mode<synchronous>, transform_indices = @transform_1, window_bounds = array<i64: 32, 16>}, {pipeline_mode = #tpu.pipeline_mode<synchronous>, transform_indices = @transform_2, window_bounds = array<i64: 32, 1>}, {pipeline_mode = #tpu.pipeline_mode<synchronous>, transform_indices = @transform_3, window_bounds = array<i64: 32, 1>}, {pipeline_mode = #tpu.pipeline_mode<synchronous>, transform_indices = @transform_4, window_bounds = array<i64: 16, 32>}, {pipeline_mode = #tpu.pipeline_mode<synchronous>, transform_indices = @transform_5, window_bounds = array<i64: 16, 1>}, {pipeline_mode = #tpu.pipeline_mode<synchronous>, transform_indices = @transform_6, window_bounds = array<i64: 16, 1>}]} {
    %c0_i32 = arith.constant 0 : i32
    %0 = arith.cmpi eq, %arg0, %c0_i32 : i32
    %1 = arith.extui %0 : i1 to i32
    %c0_i32_0 = arith.constant 0 : i32
    %2 = arith.cmpi ne, %1, %c0_i32_0 : i32
    scf.if %2 {
      %cst_23 = arith.constant 0.000000e+00 : f32
      %37 = vector.broadcast %cst_23 : f32 to vector<16x1xf32>
      %c0_24 = arith.constant 0 : index
      %c0_25 = arith.constant 0 : index
      %38 = vector.load %arg6[%c0_24, %c0_25] : memref<16x1xf32, #tpu.memory_space<vmem>>, vector<16x1xf32>
      tpu.vector_store %arg6[%c0_24, %c0_25], %37 {strides = array<i32>} : memref<16x1xf32, #tpu.memory_space<vmem>>, vector<16x1xf32>,
      %cst_26 = arith.constant 0.000000e+00 : f32
      %39 = vector.broadcast %cst_26 : f32 to vector<16x1xf32>
      %c0_27 = arith.constant 0 : index
      %c0_28 = arith.constant 0 : index
      %40 = vector.load %arg7[%c0_27, %c0_28] : memref<16x1xf32, #tpu.memory_space<vmem>>, vector<16x1xf32>
      tpu.vector_store %arg7[%c0_27, %c0_28], %39 {strides = array<i32>} : memref<16x1xf32, #tpu.memory_space<vmem>>, vector<16x1xf32>,
    } else {
    }
    %c0 = arith.constant 0 : index
    %c0_1 = arith.constant 0 : index
    %3 = vector.load %arg2[%c0, %c0_1] : memref<32x16xbf16, #tpu.memory_space<vmem>>, vector<32x16xbf16>
    %c0_2 = arith.constant 0 : index
    %c0_3 = arith.constant 0 : index
    %4 = vector.load %arg1[%c0_2, %c0_3] : memref<16x256xbf16, #tpu.memory_space<vmem>>, vector<16x256xbf16>
    %cst = arith.constant dense<0.000000e+00> : vector<32x256xf32>
    %5 = tpu.matmul %3, %4, %cst {dimension_numbers = #tpu.dot_dimension_numbers<[1], [0], [0], [1], [0, 0, 1, 1], [], []>} : vector<32x16xbf16>, vector<16x256xbf16>, vector<32x256xf32> -> vector<32x256xf32>
    %c0_4 = arith.constant 0 : index
    %c0_5 = arith.constant 0 : index
    %6 = vector.load %arg3[%c0_4, %c0_5] : memref<32x1xf32, #tpu.memory_space<vmem>>, vector<32x1xf32>
    %7 = vector.broadcast %6 : vector<32x1xf32> to vector<32x256xf32>
    %8 = arith.mulf %5, %7 : vector<32x256xf32>
    %c0_6 = arith.constant 0 : index
    %c0_7 = arith.constant 0 : index
    %9 = vector.load %arg4[%c0_6, %c0_7] : memref<32x1xf32, #tpu.memory_space<vmem>>, vector<32x1xf32>
    %10 = vector.broadcast %9 : vector<32x1xf32> to vector<32x256xf32>
    %11 = arith.addf %8, %10 : vector<32x256xf32>
    %cst_8 = arith.constant 0.000000e+00 : f32
    %12 = vector.broadcast %cst_8 : f32 to vector<32x256xf32>
    %13 = arith.maximumf %11, %12 : vector<32x256xf32>
    %c0_9 = arith.constant 0 : index
    %c0_10 = arith.constant 0 : index
    %14 = vector.load %arg5[%c0_9, %c0_10] : memref<16x32xbf16, #tpu.memory_space<vmem>>, vector<16x32xbf16>
    %15 = arith.truncf %13 : vector<32x256xf32> to vector<32x256xbf16>
    %cst_11 = arith.constant dense<0.000000e+00> : vector<16x256xf32>
    %16 = tpu.matmul %14, %15, %cst_11 {dimension_numbers = #tpu.dot_dimension_numbers<[1], [0], [0], [1], [0, 0, 1, 1], [], []>} : vector<16x32xbf16>, vector<32x256xbf16>, vector<16x256xf32> -> vector<16x256xf32>
    %17 = tpu.iota {dimensions = array<i32: 1>} : vector<1x256xi32>
    %c256_i32 = arith.constant 256 : i32
    %18 = arith.muli %arg0, %c256_i32 : i32
    %c1000_i32 = arith.constant 1000 : i32
    %19 = arith.subi %c1000_i32, %18 : i32
    %20 = vector.broadcast %19 : i32 to vector<1x256xi32>
    %21 = arith.cmpi slt, %17, %20 : vector<1x256xi32>
    %cst_12 = arith.constant 0.000000e+00 : f32
    %22 = vector.shape_cast %21 : vector<1x256xi1> to vector<1x256xi1>
    %23 = vector.broadcast %22 : vector<1x256xi1> to vector<16x256xi1>
    %24 = vector.broadcast %cst_12 : f32 to vector<16x256xf32>
    %25 = arith.select %23, %16, %24 : vector<16x256xi1>, vector<16x256xf32>
    %c0_13 = arith.constant 0 : index
    %c0_14 = arith.constant 0 : index
    %26 = vector.load %arg6[%c0_13, %c0_14] : memref<16x1xf32, #tpu.memory_space<vmem>>, vector<16x1xf32>
    %cst_15 = arith.constant dense<0.000000e+00> : vector<16xf32>
    %27 = vector.multi_reduction <add>, %25, %cst_15 [1] : vector<16x256xf32> to vector<16xf32>
    %28 = vector.shape_cast %27 : vector<16xf32> to vector<16x1xf32>
    %29 = arith.addf %26, %28 : vector<16x1xf32>
    %c0_16 = arith.constant 0 : index
    %c0_17 = arith.constant 0 : index
    %30 = vector.load %arg6[%c0_16, %c0_17] : memref<16x1xf32, #tpu.memory_space<vmem>>, vector<16x1xf32>
    tpu.vector_store %arg6[%c0_16, %c0_17], %29 {strides = array<i32>} : memref<16x1xf32, #tpu.memory_space<vmem>>, vector<16x1xf32>,
    %c0_18 = arith.constant 0 : index
    %c0_19 = arith.constant 0 : index
    %31 = vector.load %arg7[%c0_18, %c0_19] : memref<16x1xf32, #tpu.memory_space<vmem>>, vector<16x1xf32>
    %32 = arith.mulf %25, %25 : vector<16x256xf32>
    %cst_20 = arith.constant dense<0.000000e+00> : vector<16xf32>
    %33 = vector.multi_reduction <add>, %32, %cst_20 [1] : vector<16x256xf32> to vector<16xf32>
    %34 = vector.shape_cast %33 : vector<16xf32> to vector<16x1xf32>
    %35 = arith.addf %31, %34 : vector<16x1xf32>
    %c0_21 = arith.constant 0 : index
    %c0_22 = arith.constant 0 : index
    %36 = vector.load %arg7[%c0_21, %c0_22] : memref<16x1xf32, #tpu.memory_space<vmem>>, vector<16x1xf32>
    tpu.vector_store %arg7[%c0_21, %c0_22], %35 {strides = array<i32>} : memref<16x1xf32, #tpu.memory_space<vmem>>, vector<16x1xf32>,
    return
  }
  func.func @transform_0(%arg0: i32) -> (i32, i32) {
    %c0_i32 = arith.constant 0 : i32
    %c0_i32_0 = arith.constant 0 : i32
    return %c0_i32, %arg0 : i32, i32
  }
  func.func @transform_1(%arg0: i32) -> (i32, i32) {
    %c0_i32 = arith.constant 0 : i32
    %c0_i32_0 = arith.constant 0 : i32
    %c0_i32_1 = arith.constant 0 : i32
    return %c0_i32, %c0_i32_0 : i32, i32
  }
  func.func @transform_2(%arg0: i32) -> (i32, i32) {
    %c0_i32 = arith.constant 0 : i32
    %c0_i32_0 = arith.constant 0 : i32
    %c0_i32_1 = arith.constant 0 : i32
    return %c0_i32, %c0_i32_0 : i32, i32
  }
  func.func @transform_3(%arg0: i32) -> (i32, i32) {
    %c0_i32 = arith.constant 0 : i32
    %c0_i32_0 = arith.constant 0 : i32
    %c0_i32_1 = arith.constant 0 : i32
    return %c0_i32, %c0_i32_0 : i32, i32
  }
  func.func @transform_4(%arg0: i32) -> (i32, i32) {
    %c0_i32 = arith.constant 0 : i32
    %c0_i32_0 = arith.constant 0 : i32
    %c0_i32_1 = arith.constant 0 : i32
    return %c0_i32, %c0_i32_0 : i32, i32
  }
  func.func @transform_5(%arg0: i32) -> (i32, i32) {
    %c0_i32 = arith.constant 0 : i32
    %c0_i32_0 = arith.constant 0 : i32
    %c0_i32_1 = arith.constant 0 : i32
    return %c0_i32, %c0_i32_0 : i32, i32
  }
  func.func @transform_6(%arg0: i32) -> (i32, i32) {
    %c0_i32 = arith.constant 0 : i32
    %c0_i32_0 = arith.constant 0 : i32
    %c0_i32_1 = arith.constant 0 : i32
    return %c0_i32, %c0_i32_0 : i32, i32
  }
}

module attributes {stable_mosaic.version = 11 : i64} {
  func.func @_pass1_kernel(%arg0: i32, %arg1: memref<16x256xbf16, #tpu.memory_space<vmem>>, %arg2: memref<32x16xbf16, #tpu.memory_space<vmem>>, %arg3: memref<32x1xf32, #tpu.memory_space<vmem>>, %arg4: memref<32x1xf32, #tpu.memory_space<vmem>>) attributes {dimension_semantics = [#tpu.dimension_semantics<arbitrary>], iteration_bounds = array<i64: 4>, scalar_prefetch = 0 : i64, scratch_operands = 0 : i64, tpu.core_type = #tpu.core_type<tc>, window_params = [{transform_indices = @transform_0, window_bounds = array<i64: 16, 256>}, {pipeline_mode = #tpu.pipeline_mode<synchronous>, transform_indices = @transform_1, window_bounds = array<i64: 32, 16>}, {pipeline_mode = #tpu.pipeline_mode<synchronous>, transform_indices = @transform_2, window_bounds = array<i64: 32, 1>}, {pipeline_mode = #tpu.pipeline_mode<synchronous>, transform_indices = @transform_3, window_bounds = array<i64: 32, 1>}]} {
    %c0_i32 = arith.constant 0 : i32
    %0 = arith.cmpi eq, %arg0, %c0_i32 : i32
    %1 = arith.extui %0 : i1 to i32
    %c0_i32_0 = arith.constant 0 : i32
    %2 = arith.cmpi ne, %1, %c0_i32_0 : i32
    scf.if %2 {
      %cst_15 = arith.constant 0.000000e+00 : f32
      %27 = vector.broadcast %cst_15 : f32 to vector<32x1xf32>
      %c0_16 = arith.constant 0 : index
      %c0_17 = arith.constant 0 : index
      %28 = vector.load %arg3[%c0_16, %c0_17] : memref<32x1xf32, #tpu.memory_space<vmem>>, vector<32x1xf32>
      tpu.vector_store %arg3[%c0_16, %c0_17], %27 {strides = array<i32>} : memref<32x1xf32, #tpu.memory_space<vmem>>, vector<32x1xf32>,
      %cst_18 = arith.constant 0.000000e+00 : f32
      %29 = vector.broadcast %cst_18 : f32 to vector<32x1xf32>
      %c0_19 = arith.constant 0 : index
      %c0_20 = arith.constant 0 : index
      %30 = vector.load %arg4[%c0_19, %c0_20] : memref<32x1xf32, #tpu.memory_space<vmem>>, vector<32x1xf32>
      tpu.vector_store %arg4[%c0_19, %c0_20], %29 {strides = array<i32>} : memref<32x1xf32, #tpu.memory_space<vmem>>, vector<32x1xf32>,
    } else {
    }
    %c0 = arith.constant 0 : index
    %c0_1 = arith.constant 0 : index
    %3 = vector.load %arg1[%c0, %c0_1] : memref<16x256xbf16, #tpu.memory_space<vmem>>, vector<16x256xbf16>
    %4 = tpu.iota {dimensions = array<i32: 1>} : vector<1x256xi32>
    %c256_i32 = arith.constant 256 : i32
    %5 = arith.muli %arg0, %c256_i32 : i32
    %c1000_i32 = arith.constant 1000 : i32
    %6 = arith.subi %c1000_i32, %5 : i32
    %7 = vector.broadcast %6 : i32 to vector<1x256xi32>
    %8 = arith.cmpi slt, %4, %7 : vector<1x256xi32>
    %c0_i32_2 = arith.constant 0 : i32
    %9 = arith.sitofp %c0_i32_2 : i32 to bf16
    %10 = vector.shape_cast %8 : vector<1x256xi1> to vector<1x256xi1>
    %11 = vector.broadcast %10 : vector<1x256xi1> to vector<16x256xi1>
    %12 = vector.broadcast %9 : bf16 to vector<16x256xbf16>
    %13 = arith.select %11, %3, %12 : vector<16x256xi1>, vector<16x256xbf16>
    %c0_3 = arith.constant 0 : index
    %c0_4 = arith.constant 0 : index
    %14 = vector.load %arg2[%c0_3, %c0_4] : memref<32x16xbf16, #tpu.memory_space<vmem>>, vector<32x16xbf16>
    %cst = arith.constant dense<0.000000e+00> : vector<32x256xf32>
    %15 = tpu.matmul %14, %13, %cst {dimension_numbers = #tpu.dot_dimension_numbers<[1], [0], [0], [1], [0, 0, 1, 1], [], []>} : vector<32x16xbf16>, vector<16x256xbf16>, vector<32x256xf32> -> vector<32x256xf32>
    %c0_5 = arith.constant 0 : index
    %c0_6 = arith.constant 0 : index
    %16 = vector.load %arg3[%c0_5, %c0_6] : memref<32x1xf32, #tpu.memory_space<vmem>>, vector<32x1xf32>
    %cst_7 = arith.constant dense<0.000000e+00> : vector<32xf32>
    %17 = vector.multi_reduction <add>, %15, %cst_7 [1] : vector<32x256xf32> to vector<32xf32>
    %18 = vector.shape_cast %17 : vector<32xf32> to vector<32x1xf32>
    %19 = arith.addf %16, %18 : vector<32x1xf32>
    %c0_8 = arith.constant 0 : index
    %c0_9 = arith.constant 0 : index
    %20 = vector.load %arg3[%c0_8, %c0_9] : memref<32x1xf32, #tpu.memory_space<vmem>>, vector<32x1xf32>
    tpu.vector_store %arg3[%c0_8, %c0_9], %19 {strides = array<i32>} : memref<32x1xf32, #tpu.memory_space<vmem>>, vector<32x1xf32>,
    %c0_10 = arith.constant 0 : index
    %c0_11 = arith.constant 0 : index
    %21 = vector.load %arg4[%c0_10, %c0_11] : memref<32x1xf32, #tpu.memory_space<vmem>>, vector<32x1xf32>
    %22 = arith.mulf %15, %15 : vector<32x256xf32>
    %cst_12 = arith.constant dense<0.000000e+00> : vector<32xf32>
    %23 = vector.multi_reduction <add>, %22, %cst_12 [1] : vector<32x256xf32> to vector<32xf32>
    %24 = vector.shape_cast %23 : vector<32xf32> to vector<32x1xf32>
    %25 = arith.addf %21, %24 : vector<32x1xf32>
    %c0_13 = arith.constant 0 : index
    %c0_14 = arith.constant 0 : index
    %26 = vector.load %arg4[%c0_13, %c0_14] : memref<32x1xf32, #tpu.memory_space<vmem>>, vector<32x1xf32>
    tpu.vector_store %arg4[%c0_13, %c0_14], %25 {strides = array<i32>} : memref<32x1xf32, #tpu.memory_space<vmem>>, vector<32x1xf32>,
    return
  }
  func.func @transform_0(%arg0: i32) -> (i32, i32) {
    %c0_i32 = arith.constant 0 : i32
    %c0_i32_0 = arith.constant 0 : i32
    return %c0_i32, %arg0 : i32, i32
  }
  func.func @transform_1(%arg0: i32) -> (i32, i32) {
    %c0_i32 = arith.constant 0 : i32
    %c0_i32_0 = arith.constant 0 : i32
    %c0_i32_1 = arith.constant 0 : i32
    return %c0_i32, %c0_i32_0 : i32, i32
  }
  func.func @transform_2(%arg0: i32) -> (i32, i32) {
    %c0_i32 = arith.constant 0 : i32
    %c0_i32_0 = arith.constant 0 : i32
    %c0_i32_1 = arith.constant 0 : i32
    return %c0_i32, %c0_i32_0 : i32, i32
  }
  func.func @transform_3(%arg0: i32) -> (i32, i32) {
    %c0_i32 = arith.constant 0 : i32
    %c0_i32_0 = arith.constant 0 : i32
    %c0_i32_1 = arith.constant 0 : i32
    return %c0_i32, %c0_i32_0 : i32, i32
  }
}

module attributes {stable_mosaic.version = 11 : i64} {
  func.func @_pass3_kernel(%arg0: i32, %arg1: memref<16x256xbf16, #tpu.memory_space<vmem>>, %arg2: memref<32x16xbf16, #tpu.memory_space<vmem>>, %arg3: memref<32x1xf32, #tpu.memory_space<vmem>>, %arg4: memref<32x1xf32, #tpu.memory_space<vmem>>, %arg5: memref<16x32xbf16, #tpu.memory_space<vmem>>, %arg6: memref<16x1xf32, #tpu.memory_space<vmem>>, %arg7: memref<16x1xf32, #tpu.memory_space<vmem>>, %arg8: memref<16x256xf32, #tpu.memory_space<vmem>>) attributes {dimension_semantics = [#tpu.dimension_semantics<parallel>], iteration_bounds = array<i64: 4>, scalar_prefetch = 0 : i64, scratch_operands = 0 : i64, tpu.core_type = #tpu.core_type<tc>, window_params = [{transform_indices = @transform_0, window_bounds = array<i64: 16, 256>}, {pipeline_mode = #tpu.pipeline_mode<synchronous>, transform_indices = @transform_1, window_bounds = array<i64: 32, 16>}, {pipeline_mode = #tpu.pipeline_mode<synchronous>, transform_indices = @transform_2, window_bounds = array<i64: 32, 1>}, {pipeline_mode = #tpu.pipeline_mode<synchronous>, transform_indices = @transform_3, window_bounds = array<i64: 32, 1>}, {pipeline_mode = #tpu.pipeline_mode<synchronous>, transform_indices = @transform_4, window_bounds = array<i64: 16, 32>}, {pipeline_mode = #tpu.pipeline_mode<synchronous>, transform_indices = @transform_5, window_bounds = array<i64: 16, 1>}, {pipeline_mode = #tpu.pipeline_mode<synchronous>, transform_indices = @transform_6, window_bounds = array<i64: 16, 1>}, {transform_indices = @transform_7, window_bounds = array<i64: 16, 256>}]} {
    %c0 = arith.constant 0 : index
    %c0_0 = arith.constant 0 : index
    %0 = vector.load %arg2[%c0, %c0_0] : memref<32x16xbf16, #tpu.memory_space<vmem>>, vector<32x16xbf16>
    %c0_1 = arith.constant 0 : index
    %c0_2 = arith.constant 0 : index
    %1 = vector.load %arg1[%c0_1, %c0_2] : memref<16x256xbf16, #tpu.memory_space<vmem>>, vector<16x256xbf16>
    %cst = arith.constant dense<0.000000e+00> : vector<32x256xf32>
    %2 = tpu.matmul %0, %1, %cst {dimension_numbers = #tpu.dot_dimension_numbers<[1], [0], [0], [1], [0, 0, 1, 1], [], []>} : vector<32x16xbf16>, vector<16x256xbf16>, vector<32x256xf32> -> vector<32x256xf32>
    %c0_3 = arith.constant 0 : index
    %c0_4 = arith.constant 0 : index
    %3 = vector.load %arg3[%c0_3, %c0_4] : memref<32x1xf32, #tpu.memory_space<vmem>>, vector<32x1xf32>
    %4 = vector.broadcast %3 : vector<32x1xf32> to vector<32x256xf32>
    %5 = arith.mulf %2, %4 : vector<32x256xf32>
    %c0_5 = arith.constant 0 : index
    %c0_6 = arith.constant 0 : index
    %6 = vector.load %arg4[%c0_5, %c0_6] : memref<32x1xf32, #tpu.memory_space<vmem>>, vector<32x1xf32>
    %7 = vector.broadcast %6 : vector<32x1xf32> to vector<32x256xf32>
    %8 = arith.addf %5, %7 : vector<32x256xf32>
    %cst_7 = arith.constant 0.000000e+00 : f32
    %9 = vector.broadcast %cst_7 : f32 to vector<32x256xf32>
    %10 = arith.maximumf %8, %9 : vector<32x256xf32>
    %c0_8 = arith.constant 0 : index
    %c0_9 = arith.constant 0 : index
    %11 = vector.load %arg5[%c0_8, %c0_9] : memref<16x32xbf16, #tpu.memory_space<vmem>>, vector<16x32xbf16>
    %12 = arith.truncf %10 : vector<32x256xf32> to vector<32x256xbf16>
    %cst_10 = arith.constant dense<0.000000e+00> : vector<16x256xf32>
    %13 = tpu.matmul %11, %12, %cst_10 {dimension_numbers = #tpu.dot_dimension_numbers<[1], [0], [0], [1], [0, 0, 1, 1], [], []>} : vector<16x32xbf16>, vector<32x256xbf16>, vector<16x256xf32> -> vector<16x256xf32>
    %c0_11 = arith.constant 0 : index
    %c0_12 = arith.constant 0 : index
    %14 = vector.load %arg6[%c0_11, %c0_12] : memref<16x1xf32, #tpu.memory_space<vmem>>, vector<16x1xf32>
    %15 = vector.broadcast %14 : vector<16x1xf32> to vector<16x256xf32>
    %16 = arith.mulf %13, %15 : vector<16x256xf32>
    %c0_13 = arith.constant 0 : index
    %c0_14 = arith.constant 0 : index
    %17 = vector.load %arg7[%c0_13, %c0_14] : memref<16x1xf32, #tpu.memory_space<vmem>>, vector<16x1xf32>
    %18 = vector.broadcast %17 : vector<16x1xf32> to vector<16x256xf32>
    %19 = arith.addf %16, %18 : vector<16x256xf32>
    %cst_15 = arith.constant 0.000000e+00 : f32
    %20 = vector.broadcast %cst_15 : f32 to vector<16x256xf32>
    %21 = arith.maximumf %19, %20 : vector<16x256xf32>
    %c0_16 = arith.constant 0 : index
    %c0_17 = arith.constant 0 : index
    %22 = vector.load %arg8[%c0_16, %c0_17] : memref<16x256xf32, #tpu.memory_space<vmem>>, vector<16x256xf32>
    tpu.vector_store %arg8[%c0_16, %c0_17], %21 {strides = array<i32>} : memref<16x256xf32, #tpu.memory_space<vmem>>, vector<16x256xf32>,
    return
  }
  func.func @transform_0(%arg0: i32) -> (i32, i32) {
    %c0_i32 = arith.constant 0 : i32
    %c0_i32_0 = arith.constant 0 : i32
    return %c0_i32, %arg0 : i32, i32
  }
  func.func @transform_1(%arg0: i32) -> (i32, i32) {
    %c0_i32 = arith.constant 0 : i32
    %c0_i32_0 = arith.constant 0 : i32
    %c0_i32_1 = arith.constant 0 : i32
    return %c0_i32, %c0_i32_0 : i32, i32
  }
  func.func @transform_2(%arg0: i32) -> (i32, i32) {
    %c0_i32 = arith.constant 0 : i32
    %c0_i32_0 = arith.constant 0 : i32
    %c0_i32_1 = arith.constant 0 : i32
    return %c0_i32, %c0_i32_0 : i32, i32
  }
  func.func @transform_3(%arg0: i32) -> (i32, i32) {
    %c0_i32 = arith.constant 0 : i32
    %c0_i32_0 = arith.constant 0 : i32
    %c0_i32_1 = arith.constant 0 : i32
    return %c0_i32, %c0_i32_0 : i32, i32
  }
  func.func @transform_4(%arg0: i32) -> (i32, i32) {
    %c0_i32 = arith.constant 0 : i32
    %c0_i32_0 = arith.constant 0 : i32
    %c0_i32_1 = arith.constant 0 : i32
    return %c0_i32, %c0_i32_0 : i32, i32
  }
  func.func @transform_5(%arg0: i32) -> (i32, i32) {
    %c0_i32 = arith.constant 0 : i32
    %c0_i32_0 = arith.constant 0 : i32
    %c0_i32_1 = arith.constant 0 : i32
    return %c0_i32, %c0_i32_0 : i32, i32
  }
  func.func @transform_6(%arg0: i32) -> (i32, i32) {
    %c0_i32 = arith.constant 0 : i32
    %c0_i32_0 = arith.constant 0 : i32
    %c0_i32_1 = arith.constant 0 : i32
    return %c0_i32, %c0_i32_0 : i32, i32
  }
  func.func @transform_7(%arg0: i32) -> (i32, i32) {
    %c0_i32 = arith.constant 0 : i32
    %c0_i32_0 = arith.constant 0 : i32
    return %c0_i32, %arg0 : i32, i32
  }
}

</mosaic_0001>

<llo_original>
// kernel: apply_nodes.4
$region0: #{apply_nodes.4}
  #allocation0 [shape = 'u32[]', space=smem, size = 0x4, offset = 0x4, fixed_abs, tag = 'smem constant byte address 0x4 - core index']
  #allocation1 [shape = 'u32[72,128]{1,0:T(1,128)}', space=vmem, size = 0x9000, scoped, tag = 'internal scratch']
  %s0 = inlined_call_operand.vmem [shape: bf16[16,1000], index: 0, kind: input, shape index: {}]
  %s1 = inlined_call_operand.vmem [shape: bf16[32,16], index: 1, kind: input, shape index: {}]
  %s2 = inlined_call_operand.vmem [shape: f32[32,1], index: 2, kind: input, shape index: {}]
  %s3 = inlined_call_operand.vmem [shape: f32[32,1], index: 3, kind: input, shape index: {}]
  %s4 = inlined_call_operand.vmem [shape: bf16[16,32], index: 4, kind: input, shape index: {}]
  %s5 = inlined_call_operand.vmem [shape: f32[16,1], index: 5, kind: output, shape index: {0}]
  %s6 = inlined_call_operand.vmem [shape: f32[16,1], index: 6, kind: output, shape index: {1}]
  %7 = xla_tuple %s5, %s6
  %s8 = sld [smem:[#allocation0]]
  $region103: #{apply_nodes.4} parent=0
    _
  %s10 = ssub.s32 1, %s8
  %s11 = scalar_select 0, %s10, %s8
  $region1: #{apply_nodes.4} parent=0
    #allocation2 [shape = 'u8[16384]{0}', space=vmem, size = 0x4000, scoped, tag = 'input window, operand 0']
    loop: start=0, step=1, limit=6
    $region2: #{apply_nodes.4} parent=1 // loop_pre_header
      _
    $region3: #{apply_nodes.4} parent=1 // loop_header
      %s13 = sphi 0, %s17
      %p14 = scmp.ge.s32.totalorder %s13, 6
      %s23 = sphi 0, %s25
      %s26 = sphi 0, %s23
      %s27 = sphi 0, %s26
      %s43 = sphi 0, %s27
      %s47 = sphi 0, %s47
      %s49 = sphi 0, %s47
      %s50 = sphi 0, %s49
      %s64 = sphi 0, %s50
      %s68 = sphi 0, %s68
      %s70 = sphi 0, %s68
      %s71 = sphi 0, %s70
      %s85 = sphi 0, %s71
      %s89 = sphi 0, %s89
      %s91 = sphi 0, %s89
      %s92 = sphi 0, %s91
      %s106 = sphi 0, %s92
      %s110 = sphi 0, %s110
      %s112 = sphi 0, %s110
      %s113 = sphi 0, %s112
      %s127 = sphi 0, %s113
      %s131 = sphi 0, %s131
      %s133 = sphi 0, %s131
      %s134 = sphi 0, %s133
      %s148 = sphi 0, %s134
      %s152 = sphi 0, %s152
      %s154 = sphi 0, %s152
      %s155 = sphi 0, %s154
      %s169 = sphi 0, %s155
    $region4: #{apply_nodes.4} parent=1 // loop_header_branch
      %16 = sbr.rel (%p14) target = $region8
    $region5: #{apply_nodes.4} parent=1 // loop_body
      %s18 = ssub.s32 %s13, 1
      %s19 = ssub.s32 %s13, 2
      %s20 = sadd.s32 %s13, 1
      %s21 = ssub.s32 %s13, %s20
      %p22 = scmp.eq.s32.totalorder %s21, 0
      %s24 = sadd.s32 %s23, 1
      %s25 = scalar_select %p22, %s23, %s24
      %p28 = pneg %p22
      %p29 = scmp.eq.s32.totalorder %s13, 3
      %p30 = por %p28, %p29
      %p31 = scmp.ne.s32.totalorder %s23, %s26
      %p32 = scmp.eq.s32.totalorder %s13, 0
      %p33 = por %p31, %p32
      %p34 = scmp.ne.s32.totalorder %s23, %s26
      %p35 = scmp.eq.s32.totalorder %s18, 3
      %p36 = por %p34, %p35
      %p37 = scmp.ne.s32.totalorder %s26, %s27
      %p38 = scmp.eq.s32.totalorder %s18, 0
      %p39 = por %p37, %p38
      %p40 = scmp.ne.s32.totalorder %s26, %s27
      %p41 = scmp.eq.s32.totalorder %s19, 3
      %p42 = por %p40, %p41
      %p44 = scmp.ne.s32.totalorder %s27, %s43
      %p45 = scmp.eq.s32.totalorder %s19, 0
      %p46 = por %p44, %p45
      %s48 = sadd.s32 %s47, 1
      %p51 = scmp.eq.s32.totalorder %s13, 3
      %p52 = scmp.ne.s32.totalorder %s47, %s49
      %p53 = scmp.eq.s32.totalorder %s13, 0
      %p54 = por %p52, %p53
      %p55 = scmp.ne.s32.totalorder %s47, %s49
      %p56 = scmp.eq.s32.totalorder %s18, 3
      %p57 = por %p55, %p56
      %p58 = scmp.ne.s32.totalorder %s49, %s50
      %p59 = scmp.eq.s32.totalorder %s18, 0
      %p60 = por %p58, %p59
      %p61 = scmp.ne.s32.totalorder %s49, %s50
      %p62 = scmp.eq.s32.totalorder %s19, 3
      %p63 = por %p61, %p62
      %p65 = scmp.ne.s32.totalorder %s50, %s64
      %p66 = scmp.eq.s32.totalorder %s19, 0
      %p67 = por %p65, %p66
      %s69 = sadd.s32 %s68, 1
      %p72 = scmp.eq.s32.totalorder %s13, 3
      %p73 = scmp.ne.s32.totalorder %s68, %s70
      %p74 = scmp.eq.s32.totalorder %s13, 0
      %p75 = por %p73, %p74
      %p76 = scmp.ne.s32.totalorder %s68, %s70
      %p77 = scmp.eq.s32.totalorder %s18, 3
      %p78 = por %p76, %p77
      %p79 = scmp.ne.s32.totalorder %s70, %s71
      %p80 = scmp.eq.s32.totalorder %s18, 0
      %p81 = por %p79, %p80
      %p82 = scmp.ne.s32.totalorder %s70, %s71
      %p83 = scmp.eq.s32.totalorder %s19, 3
      %p84 = por %p82, %p83
      %p86 = scmp.ne.s32.totalorder %s71, %s85
      %p87 = scmp.eq.s32.totalorder %s19, 0
      %p88 = por %p86, %p87
      %s90 = sadd.s32 %s89, 1
      %p93 = scmp.eq.s32.totalorder %s13, 3
      %p94 = scmp.ne.s32.totalorder %s89, %s91
      %p95 = scmp.eq.s32.totalorder %s13, 0
      %p96 = por %p94, %p95
      %p97 = scmp.ne.s32.totalorder %s89, %s91
      %p98 = scmp.eq.s32.totalorder %s18, 3
      %p99 = por %p97, %p98
      %p100 = scmp.ne.s32.totalorder %s91, %s92
      %p101 = scmp.eq.s32.totalorder %s18, 0
      %p102 = por %p100, %p101
      %p103 = scmp.ne.s32.totalorder %s91, %s92
      %p104 = scmp.eq.s32.totalorder %s19, 3
      %p105 = por %p103, %p104
      %p107 = scmp.ne.s32.totalorder %s92, %s106
      %p108 = scmp.eq.s32.totalorder %s19, 0
      %p109 = por %p107, %p108
      %s111 = sadd.s32 %s110, 1
      %p114 = scmp.eq.s32.totalorder %s13, 3
      %p115 = scmp.ne.s32.totalorder %s110, %s112
      %p116 = scmp.eq.s32.totalorder %s13, 0
      %p117 = por %p115, %p116
      %p118 = scmp.ne.s32.totalorder %s110, %s112
      %p119 = scmp.eq.s32.totalorder %s18, 3
      %p120 = por %p118, %p119
      %p121 = scmp.ne.s32.totalorder %s112, %s113
      %p122 = scmp.eq.s32.totalorder %s18, 0
      %p123 = por %p121, %p122
      %p124 = scmp.ne.s32.totalorder %s112, %s113
      %p125 = scmp.eq.s32.totalorder %s19, 3
      %p126 = por %p124, %p125
      %p128 = scmp.ne.s32.totalorder %s113, %s127
      %p129 = scmp.eq.s32.totalorder %s19, 0
      %p130 = por %p128, %p129
      %s132 = sadd.s32 %s131, 1
      %p135 = scmp.eq.s32.totalorder %s13, 3
      %p136 = scmp.ne.s32.totalorder %s131, %s133
      %p137 = scmp.eq.s32.totalorder %s13, 0
      %p138 = por %p136, %p137
      %p139 = scmp.ne.s32.totalorder %s131, %s133
      %p140 = scmp.eq.s32.totalorder %s18, 3
      %p141 = por %p139, %p140
      %p142 = scmp.ne.s32.totalorder %s133, %s134
      %p143 = scmp.eq.s32.totalorder %s18, 0
      %p144 = por %p142, %p143
      %p145 = scmp.ne.s32.totalorder %s133, %s134
      %p146 = scmp.eq.s32.totalorder %s19, 3
      %p147 = por %p145, %p146
      %p149 = scmp.ne.s32.totalorder %s134, %s148
      %p150 = scmp.eq.s32.totalorder %s19, 0
      %p151 = por %p149, %p150
      %s153 = sadd.s32 %s152, 1
      %p156 = scmp.eq.s32.totalorder %s13, 3
      %p157 = scmp.ne.s32.totalorder %s152, %s154
      %p158 = scmp.eq.s32.totalorder %s13, 0
      %p159 = por %p157, %p158
      %p160 = scmp.ne.s32.totalorder %s152, %s154
      %p161 = scmp.eq.s32.totalorder %s18, 3
      %p162 = por %p160, %p161
      %p163 = scmp.ne.s32.totalorder %s154, %s155
      %p164 = scmp.eq.s32.totalorder %s18, 0
      %p165 = por %p163, %p164
      %p166 = scmp.ne.s32.totalorder %s154, %s155
      %p167 = scmp.eq.s32.totalorder %s19, 3
      %p168 = por %p166, %p167
      %p170 = scmp.ne.s32.totalorder %s155, %s169
      %p171 = scmp.eq.s32.totalorder %s19, 0
      %p172 = por %p170, %p171
      %p173 = scmp.le.s32.totalorder 1, %s13
      %p174 = scmp.lt.s32.totalorder %s13, 5
      %p175 = pnand %p173, %p174
      %p176 = pneg %p175
      // Predicated region
      $region9: #{apply_nodes.4} parent=5 // pred_check
        _
      $region10: #{apply_nodes.4} parent=5 // pred_check_branch
        %178 = sbr.rel (%p175) target = $region12
      $region11: #{apply_nodes.4} parent=5 // pred_region
        %s179 = ssub.s32 %s13, 1
        // Predicated region
        $region13: #{apply_nodes.4} parent=11 // pred_check
          %p180 = pneg %p60
        $region14: #{apply_nodes.4} parent=11 // pred_check_branch
          %182 = sbr.rel (%p180) target = $region16
        $region15: #{apply_nodes.4} parent=11 // pred_region
          _
        $region16: #{apply_nodes.4} parent=11 // pred_fallthru
          _
        // Predicated region
        $region17: #{apply_nodes.4} parent=11 // pred_check
          %p183 = pneg %p81
        $region18: #{apply_nodes.4} parent=11 // pred_check_branch
          %185 = sbr.rel (%p183) target = $region20
        $region19: #{apply_nodes.4} parent=11 // pred_region
          _
        $region20: #{apply_nodes.4} parent=11 // pred_fallthru
          _
        // Predicated region
        $region21: #{apply_nodes.4} parent=11 // pred_check
          %p186 = pneg %p102
        $region22: #{apply_nodes.4} parent=11 // pred_check_branch
          %188 = sbr.rel (%p186) target = $region24
        $region23: #{apply_nodes.4} parent=11 // pred_region
          _
        $region24: #{apply_nodes.4} parent=11 // pred_fallthru
          _
        // Predicated region
        $region25: #{apply_nodes.4} parent=11 // pred_check
          %p189 = pneg %p123
        $region26: #{apply_nodes.4} parent=11 // pred_check_branch
          %191 = sbr.rel (%p189) target = $region28
        $region27: #{apply_nodes.4} parent=11 // pred_region
          _
        $region28: #{apply_nodes.4} parent=11 // pred_fallthru
          _
      $region12: #{apply_nodes.4} parent=5 // pred_fallthru
        _
      %p192 = scmp.lt.s32.totalorder %s13, 4
      // Predicated region
      $region29: #{apply_nodes.4} parent=5 // pred_check
        %p193 = pneg %p192
      $region30: #{apply_nodes.4} parent=5 // pred_check_branch
        %195 = sbr.rel (%p193) target = $region32
      $region31: #{apply_nodes.4} parent=5 // pred_region
        // Predicated region
        $region33: #{apply_nodes.4} parent=31 // pred_check
          %p196 = pneg %p33
        $region34: #{apply_nodes.4} parent=31 // pred_check_branch
          %198 = sbr.rel (%p196) target = $region36
        $region35: #{apply_nodes.4} parent=31 // pred_region
          %s199 = sand.u32 %s23, 1
          %s200 = sand.u32 %s23, 1
          %s201 = smul.addr %s200, 16
          %s202 = scalar_lea.vmem [#allocation2], %s201
          %s203 = smul.u32 2, %s13
          %s204 = smul.addr %s203, 4
          %s205 = scalar_lea.vmem %s0, %s204
          // Predicated region
          $region37: #{apply_nodes.4} parent=35 // pred_check
            _
          $region38: #{apply_nodes.4} parent=35 // pred_check_branch
            %207 = sbr.rel (0) target = $region40
          $region39: #{apply_nodes.4} parent=35 // pred_region
            // Predicated region
            $region41: #{apply_nodes.4} parent=39 // pred_check
              _
            $region42: #{apply_nodes.4} parent=39 // pred_check_branch
              %209 = sbr.rel (0) target = $region44
            $region43: #{apply_nodes.4} parent=39 // pred_region
              // Predicated region
              $region56: #{apply_nodes.4} parent=43 // pred_check
                _
              $region57: #{apply_nodes.4} parent=43 // pred_check_branch
                %227 = sbr.rel (0) target = $region59
              $region58: #{apply_nodes.4} parent=43 // pred_region
                loop: start=0, step=1, limit=1
                $region60: #{apply_nodes.4} parent=58 // loop_pre_header
                  _
                $region61: #{apply_nodes.4} parent=58 // loop_header
                  %s229 = sphi 0, %s233
                  %p230 = scmp.ge.s32.totalorder %s229, 1
                  %s234 = sphi %s205, %s205
                  %s235 = sphi %s202, %s202
                $region62: #{apply_nodes.4} parent=58 // loop_header_branch
                  %232 = sbr.rel (%p230) target = $region66
                $region63: #{apply_nodes.4} parent=58 // loop_body
                  %v236 = vld [vmem:[%s234] sm:$0xff]
                  %237 = vst [vmem:[%s235] sm:$0xff] %v236
                  %v238 = vld [vmem:[%s234 + $0x20] sm:$0xff]
                  %239 = vst [vmem:[%s235 + $0x8] sm:$0xff] %v238
                $region64: #{apply_nodes.4} parent=58 // loop_footer
                  %s233 = sadd.s32 1, %s229
                $region65: #{apply_nodes.4} parent=58 // loop_footer_branch
                  %228 = sbr.rel target = $region61
                $region66: #{apply_nodes.4} parent=58 // loop_exit
                  _
              $region59: #{apply_nodes.4} parent=43 // pred_fallthru
                _
              // Predicated region
              $region67: #{apply_nodes.4} parent=43 // pred_check
                _
              $region68: #{apply_nodes.4} parent=43 // pred_check_branch
                %241 = sbr.rel target = $region70
              $region69: #{apply_nodes.4} parent=43 // pred_region
                _
              $region70: #{apply_nodes.4} parent=43 // pred_fallthru
                _
            $region44: #{apply_nodes.4} parent=39 // pred_fallthru
              _
            // Predicated region
            $region45: #{apply_nodes.4} parent=39 // pred_check
              _
            $region46: #{apply_nodes.4} parent=39 // pred_check_branch
              %211 = sbr.rel target = $region48
            $region47: #{apply_nodes.4} parent=39 // pred_region
              %s213 = ssub.s32 256, 1
              loop: start=0, step=1, limit=1
              $region49: #{apply_nodes.4} parent=47 // loop_pre_header
                _
              $region50: #{apply_nodes.4} parent=47 // loop_header
                %s215 = sphi 0, %s219
                %p216 = scmp.ge.s32.totalorder %s215, 1
                %s220 = sphi %s205, %s205
                %s221 = sphi %s202, %s202
              $region51: #{apply_nodes.4} parent=47 // loop_header_branch
                %218 = sbr.rel (%p216) target = $region55
              $region52: #{apply_nodes.4} parent=47 // loop_body
                %v222 = vld [vmem:[%s220] sm:%s213]
                %223 = vst [vmem:[%s221] sm:%s213] %v222
                %v224 = vld [vmem:[%s220 + $0x20] sm:%s213]
                %225 = vst [vmem:[%s221 + $0x8] sm:%s213] %v224
              $region53: #{apply_nodes.4} parent=47 // loop_footer
                %s219 = sadd.s32 1, %s215
              $region54: #{apply_nodes.4} parent=47 // loop_footer_branch
                %214 = sbr.rel target = $region50
              $region55: #{apply_nodes.4} parent=47 // loop_exit
                _
            $region48: #{apply_nodes.4} parent=39 // pred_fallthru
              _
          $region40: #{apply_nodes.4} parent=35 // pred_fallthru
            _
          %242 = vnop
        $region36: #{apply_nodes.4} parent=31 // pred_fallthru
          _
      $region32: #{apply_nodes.4} parent=5 // pred_fallthru
        _
      %p243 = scmp.le.s32.totalorder 1, %s13
      %p244 = scmp.lt.s32.totalorder %s13, 5
      %p245 = pnand %p243, %p244
      %p246 = pneg %p245
      // Predicated region
      $region71: #{apply_nodes.4} parent=5 // pred_check
        _
      $region72: #{apply_nodes.4} parent=5 // pred_check_branch
        %248 = sbr.rel (%p245) target = $region74
      $region73: #{apply_nodes.4} parent=5 // pred_region
        %s249 = ssub.s32 %s13, 1
        %s250 = sand.u32 %s26, 1
        %s251 = sand.u32 %s26, 1
        %s252 = smul.addr %s251, 16
        %s253 = scalar_lea.vmem [#allocation2], %s252
        // Predicated region
        $region75: #{apply_nodes.4} parent=73 // pred_check
          %p254 = pneg %p39
        $region76: #{apply_nodes.4} parent=73 // pred_check_branch
          %256 = sbr.rel (%p254) target = $region78
        $region77: #{apply_nodes.4} parent=73 // pred_region
          _
        $region78: #{apply_nodes.4} parent=73 // pred_fallthru
          _
        %s257 = sand.u32 %s26, 1
        %s258 = sand.u32 %s26, 1
        %s259 = smul.addr %s258, 16
        %s260 = scalar_lea.vmem [#allocation2], %s259
        %p261 = pneg %p39
        %p262 = pneg %p36
        %p263 = pneg %p60
        %p264 = pneg %p57
        %p265 = pneg %p81
        %p266 = pneg %p78
        %p267 = pneg %p102
        %p268 = pneg %p99
        %p269 = pneg %p123
        %p270 = pneg %p120
        %p271 = pneg %p144
        %p272 = pneg %p141
        %p273 = pneg %p165
        %p274 = pneg %p162
        %s275 = smul.u32 2, %s18
        %p277 = scmp.eq.s32.totalorder %s18, 0
        // Predicated region
        $region79: #{apply_nodes.4} parent=73 // pred_check
          %p278 = pneg %p277
        $region80: #{apply_nodes.4} parent=73 // pred_check_branch
          %280 = sbr.rel (%p278) target = $region82
        $region81: #{apply_nodes.4} parent=73 // pred_region
          %vm281 = vcmask 7168
          %282 = vst.msk [vmem:[%s5] sm:$0xff] %vm281, 0.0
          %283 = vst.msk [vmem:[%s5 + $0x8] sm:$0xff] %vm281, 0.0
          %284 = vst.msk [vmem:[%s6] sm:$0xff] %vm281, 0.0
          %285 = vst.msk [vmem:[%s6 + $0x8] sm:$0xff] %vm281, 0.0
        $region82: #{apply_nodes.4} parent=73 // pred_fallthru
          _
        %v286 = vld [vmem:[%s1] sm:$0xf]
        %v287 = vld [vmem:[%s1 + $0x4] sm:$0xf]
        %v288 = vld [vmem:[%s1 + $0x8] sm:$0xf]
        %v289 = vld [vmem:[%s1 + $0xc] sm:$0xf]
        %v290 = vld [vmem:[%s253] sm:$0xff]
        %v291 = vld [vmem:[%s253 + $0x8] sm:$0xff]
        %v296 = vunpack.c.l.b16 %v286
        %v297 = vunpack.c.l.b16 %v287
        %v298 = vunpack.c.l.b16 %v288
        %v299 = vunpack.c.l.b16 %v289
        %v300 = vpack.c.b16 %v297, %v296
        %v301 = vpack.c.b16 %v299, %v298
        %v304 = vunpack.c.l.b16 %v290
        %v305 = vunpack.c.h.b16 %v290
        %v306 = vunpack.c.l.b16 %v291
        %v307 = vunpack.c.h.b16 %v291
        %v308 = vpack.c.b16 %v306, %v304
        %v309 = vpack.c.b16 %v307, %v305
        %vm312 = vcmask 130048
        %v314 = vsel %vm312, %v300, 0
        %v317 = vsel %vm312, %v301, 0
        %319 = vmatpush.bf16.msra.mxu0 0
        %320 = vmatpush.bf16.msra.mxu0 0
        %321 = vmatpush.bf16.msra.mxu0 0
        %322 = vmatpush.bf16.msra.mxu0 0
        %323 = vmatpush.bf16.msra.mxu0 0
        %324 = vmatpush.bf16.msra.mxu0 0
        %325 = vmatpush.bf16.msra.mxu0 0
        %326 = vmatpush.bf16.msra.mxu0 %v308
        %327 = vmatmul.bf16.gmra.mxu0 %v314
        %v328 = vpop.f32.mrf.mxu0
        %v329 = vadd.f32 0.0, %v328
        %v330 = vpop.f32.mrf.mxu0
        %v331 = vadd.f32 0.0, %v330
        %332 = vmatmul.bf16.gmra.mxu0 %v317
        %v333 = vpop.f32.mrf.mxu0
        %v334 = vadd.f32 0.0, %v333
        %v335 = vpop.f32.mrf.mxu0
        %v336 = vadd.f32 0.0, %v335
        %337 = vdwg.mxu0
        %338 = vmatpush.bf16.msra.mxu0 0
        %339 = vmatpush.bf16.msra.mxu0 0
        %340 = vmatpush.bf16.msra.mxu0 0
        %341 = vmatpush.bf16.msra.mxu0 0
        %342 = vmatpush.bf16.msra.mxu0 0
        %343 = vmatpush.bf16.msra.mxu0 0
        %344 = vmatpush.bf16.msra.mxu0 0
        %345 = vmatpush.bf16.msra.mxu0 %v309
        %346 = vmatmul.bf16.gmra.mxu0 %v314
        %v347 = vpop.f32.mrf.mxu0
        %v348 = vadd.f32 0.0, %v347
        %v349 = vpop.f32.mrf.mxu0
        %v350 = vadd.f32 0.0, %v349
        %351 = vmatmul.bf16.gmra.mxu0 %v317
        %v352 = vpop.f32.mrf.mxu0
        %v353 = vadd.f32 0.0, %v352
        %v354 = vpop.f32.mrf.mxu0
        %v355 = vadd.f32 0.0, %v354
        %356 = vdwg.mxu0
        %v357 = vld [vmem:[%s2] sm:$0xff]
        %v358 = vld [vmem:[%s2 + $0x8] sm:$0xff]
        %v359 = vld [vmem:[%s2 + $0x10] sm:$0xff]
        %v360 = vld [vmem:[%s2 + $0x18] sm:$0xff]
        %362 = vset.pattern.permute.xlu0 0
        %363 = vperm.xlu0 %362, %v357
        %v364 = vpop.permute.xlu0 %363
        %367 = vset.pattern.permute.xlu0 0
        %368 = vperm.xlu0 %367, %v358
        %v369 = vpop.permute.xlu0 %368
        %372 = vset.pattern.permute.xlu0 0
        %373 = vperm.xlu0 %372, %v359
        %v374 = vpop.permute.xlu0 %373
        %377 = vset.pattern.permute.xlu0 0
        %378 = vperm.xlu0 %377, %v360
        %v379 = vpop.permute.xlu0 %378
        %v381 = vmul.f32 %v329, %v364
        %v382 = vmul.f32 %v348, %v364
        %v383 = vmul.f32 %v331, %v369
        %v384 = vmul.f32 %v350, %v369
        %v385 = vmul.f32 %v334, %v374
        %v386 = vmul.f32 %v353, %v374
        %v387 = vmul.f32 %v336, %v379
        %v388 = vmul.f32 %v355, %v379
        %v389 = vld [vmem:[%s3] sm:$0xff]
        %v390 = vld [vmem:[%s3 + $0x8] sm:$0xff]
        %v391 = vld [vmem:[%s3 + $0x10] sm:$0xff]
        %v392 = vld [vmem:[%s3 + $0x18] sm:$0xff]
        %394 = vset.pattern.permute.xlu0 0
        %395 = vperm.xlu0 %394, %v389
        %v396 = vpop.permute.xlu0 %395
        %399 = vset.pattern.permute.xlu0 0
        %400 = vperm.xlu0 %399, %v390
        %v401 = vpop.permute.xlu0 %400
        %404 = vset.pattern.permute.xlu0 0
        %405 = vperm.xlu0 %404, %v391
        %v406 = vpop.permute.xlu0 %405
        %409 = vset.pattern.permute.xlu0 0
        %410 = vperm.xlu0 %409, %v392
        %v411 = vpop.permute.xlu0 %410
        %v413 = vadd.f32 %v381, %v396
        %v414 = vadd.f32 %v382, %v396
        %v415 = vadd.f32 %v383, %v401
        %v416 = vadd.f32 %v384, %v401
        %v417 = vadd.f32 %v385, %v406
        %v418 = vadd.f32 %v386, %v406
        %v419 = vadd.f32 %v387, %v411
        %v420 = vadd.f32 %v388, %v411
        %v421 = vmax.f32 %v413, 0.0
        %v422 = vmax.f32 %v414, 0.0
        %v423 = vmax.f32 %v415, 0.0
        %v424 = vmax.f32 %v416, 0.0
        %v425 = vmax.f32 %v417, 0.0
        %v426 = vmax.f32 %v418, 0.0
        %v427 = vmax.f32 %v419, 0.0
        %v428 = vmax.f32 %v420, 0.0
        %v429 = vld [vmem:[%s4] sm:$0xf]
        %v430 = vld [vmem:[%s4 + $0x4] sm:$0xf]
        %v431 = vpack.c.bf16 %v423, %v421
        %v432 = vpack.c.bf16 %v424, %v422
        %v433 = vpack.c.bf16 %v427, %v425
        %v434 = vpack.c.bf16 %v428, %v426
        %v437 = vunpack.c.l.b16 %v429
        %v438 = vunpack.c.l.b16 %v430
        %v439 = vpack.c.b16 %v438, %v437
        %vm440 = vcmask 261120
        %v442 = vsel %vm440, %v439, 0
        %444 = vmatpush.bf16.msra.mxu0 0
        %445 = vmatpush.bf16.msra.mxu0 0
        %446 = vmatpush.bf16.msra.mxu0 0
        %447 = vmatpush.bf16.msra.mxu0 0
        %448 = vmatpush.bf16.msra.mxu0 0
        %449 = vmatpush.bf16.msra.mxu0 0
        %450 = vmatpush.bf16.msra.mxu0 %v433
        %451 = vmatpush.bf16.msra.mxu0 %v431
        %452 = vmatmul.bf16.gmra.mxu0 %v442
        %v453 = vpop.f32.mrf.mxu0
        %v454 = vadd.f32 0.0, %v453
        %v455 = vpop.f32.mrf.mxu0
        %v456 = vadd.f32 0.0, %v455
        %457 = vdwg.mxu0
        %458 = vmatpush.bf16.msra.mxu0 0
        %459 = vmatpush.bf16.msra.mxu0 0
        %460 = vmatpush.bf16.msra.mxu0 0
        %461 = vmatpush.bf16.msra.mxu0 0
        %462 = vmatpush.bf16.msra.mxu0 0
        %463 = vmatpush.bf16.msra.mxu0 0
        %464 = vmatpush.bf16.msra.mxu0 %v434
        %465 = vmatpush.bf16.msra.mxu0 %v432
        %466 = vmatmul.bf16.gmra.mxu0 %v442
        %v467 = vpop.f32.mrf.mxu0
        %v468 = vadd.f32 0.0, %v467
        %v469 = vpop.f32.mrf.mxu0
        %v470 = vadd.f32 0.0, %v469
        %471 = vdwg.mxu0
        %v472 = vlaneseq
        %v473 = vand.u32 %v472, 127
        %v474 = vadd.s32 %v473, 128
        %s475 = smul.u32 %s18, 256
        %s476 = ssub.s32 1000, %s475
        %v477 = vstv %s476
        %vm478 = vcmp.lt.s32.totalorder %v473, %v477
        %vm479 = vcmp.lt.s32.totalorder %v474, %v477
        %v480 = vsel %vm478, 1, 0
        %v481 = vsel %vm479, 1, 0
        %vm482 = vcmp.eq.s32.totalorder %v480, 1
        %vm483 = vcmp.eq.s32.totalorder %v481, 1
        %v484 = vsel %vm482, %v454, 0.0
        %v485 = vsel %vm483, %v468, 0.0
        %v486 = vsel %vm482, %v456, 0.0
        %v487 = vsel %vm483, %v470, 0.0
        %v488 = vld [vmem:[%s5] sm:$0xff]
        %v489 = vld [vmem:[%s5 + $0x8] sm:$0xff]
        %v490 = vadd.f32 %v484, %v485
        %491 = vadd.xlane.f32.xlu0 %v490
        %v492 = vpop.xlane.xlu0 %491
        %v493 = vadd.f32 %v486, %v487
        %494 = vadd.xlane.f32.xlu0 %v493
        %v495 = vpop.xlane.xlu0 %494
        %v496 = vadd.f32 %v488, %v492
        %v497 = vadd.f32 %v489, %v495
        %vm498 = vcmask 7168
        %499 = vst.msk [vmem:[%s5] sm:$0xff] %vm498, %v496
        %500 = vst.msk [vmem:[%s5 + $0x8] sm:$0xff] %vm498, %v497
        %v501 = vld [vmem:[%s6] sm:$0xff]
        %v502 = vld [vmem:[%s6 + $0x8] sm:$0xff]
        %v503 = vmul.f32 %v484, %v484
        %v504 = vmul.f32 %v485, %v485
        %v505 = vmul.f32 %v486, %v486
        %v506 = vmul.f32 %v487, %v487
        %v507 = vadd.f32 %v503, %v504
        %508 = vadd.xlane.f32.xlu0 %v507
        %v509 = vpop.xlane.xlu0 %508
        %v510 = vadd.f32 %v505, %v506
        %511 = vadd.xlane.f32.xlu0 %v510
        %v512 = vpop.xlane.xlu0 %511
        %v513 = vadd.f32 %v501, %v509
        %v514 = vadd.f32 %v502, %v512
        %515 = vst.msk [vmem:[%s6] sm:$0xff] %vm498, %v513
        %516 = vst.msk [vmem:[%s6 + $0x8] sm:$0xff] %vm498, %v514
        // Predicated region
        $region83: #{apply_nodes.4} parent=73 // pred_check
          %p517 = pneg %p141
        $region84: #{apply_nodes.4} parent=73 // pred_check_branch
          %519 = sbr.rel (%p517) target = $region86
        $region85: #{apply_nodes.4} parent=73 // pred_region
          _
        $region86: #{apply_nodes.4} parent=73 // pred_fallthru
          _
        // Predicated region
        $region87: #{apply_nodes.4} parent=73 // pred_check
          %p520 = pneg %p162
        $region88: #{apply_nodes.4} parent=73 // pred_check_branch
          %522 = sbr.rel (%p520) target = $region90
        $region89: #{apply_nodes.4} parent=73 // pred_region
          _
        $region90: #{apply_nodes.4} parent=73 // pred_fallthru
          _
        // Predicated region
        $region91: #{apply_nodes.4} parent=73 // pred_check
          %p523 = pneg %p141
        $region92: #{apply_nodes.4} parent=73 // pred_check_branch
          %525 = sbr.rel (%p523) target = $region94
        $region93: #{apply_nodes.4} parent=73 // pred_region
          _
        $region94: #{apply_nodes.4} parent=73 // pred_fallthru
          _
        // Predicated region
        $region95: #{apply_nodes.4} parent=73 // pred_check
          %p526 = pneg %p162
        $region96: #{apply_nodes.4} parent=73 // pred_check_branch
          %528 = sbr.rel (%p526) target = $region98
        $region97: #{apply_nodes.4} parent=73 // pred_region
          _
        $region98: #{apply_nodes.4} parent=73 // pred_fallthru
          _
      $region74: #{apply_nodes.4} parent=5 // pred_fallthru
        _
      %p529 = scmp.le.s32.totalorder 2, %s13
      // Predicated region
      $region99: #{apply_nodes.4} parent=5 // pred_check
        %p530 = pneg %p529
      $region100: #{apply_nodes.4} parent=5 // pred_check_branch
        %532 = sbr.rel (%p530) target = $region102
      $region101: #{apply_nodes.4} parent=5 // pred_region
        %s533 = ssub.s32 %s13, 2
      $region102: #{apply_nodes.4} parent=5 // pred_fallthru
        _
    $region6: #{apply_nodes.4} parent=1 // loop_footer
      %s17 = sadd.s32 1, %s13
    $region7: #{apply_nodes.4} parent=1 // loop_footer_branch
      %12 = sbr.rel target = $region3
    $region8: #{apply_nodes.4} parent=1 // loop_exit
      _

// kernel: apply_nodes.3
$region0: #{apply_nodes.3}
  #allocation0 [shape = 'u32[]', space=smem, size = 0x4, offset = 0x4, fixed_abs, tag = 'smem constant byte address 0x4 - core index']
  #allocation1 [shape = 'u32[72,128]{1,0:T(1,128)}', space=vmem, size = 0x9000, scoped, tag = 'internal scratch']
  %s0 = inlined_call_operand.vmem [shape: bf16[16,1000], index: 0, kind: input, shape index: {}]
  %s1 = inlined_call_operand.vmem [shape: bf16[32,16], index: 1, kind: input, shape index: {}]
  %s2 = inlined_call_operand.vmem [shape: f32[32,1], index: 2, kind: output, shape index: {0}]
  %s3 = inlined_call_operand.vmem [shape: f32[32,1], index: 3, kind: output, shape index: {1}]
  %4 = xla_tuple %s2, %s3
  %s5 = sld [smem:[#allocation0]]
  $region91: #{apply_nodes.3} parent=0
    _
  %s7 = ssub.s32 1, %s5
  %s8 = scalar_select 0, %s7, %s5
  $region1: #{apply_nodes.3} parent=0
    #allocation2 [shape = 'u8[16384]{0}', space=vmem, size = 0x4000, scoped, tag = 'input window, operand 0']
    loop: start=0, step=1, limit=6
    $region2: #{apply_nodes.3} parent=1 // loop_pre_header
      _
    $region3: #{apply_nodes.3} parent=1 // loop_header
      %s10 = sphi 0, %s14
      %p11 = scmp.ge.s32.totalorder %s10, 6
      %s20 = sphi 0, %s22
      %s23 = sphi 0, %s20
      %s24 = sphi 0, %s23
      %s40 = sphi 0, %s24
      %s44 = sphi 0, %s44
      %s46 = sphi 0, %s44
      %s47 = sphi 0, %s46
      %s61 = sphi 0, %s47
      %s65 = sphi 0, %s65
      %s67 = sphi 0, %s65
      %s68 = sphi 0, %s67
      %s82 = sphi 0, %s68
      %s86 = sphi 0, %s86
      %s88 = sphi 0, %s86
      %s89 = sphi 0, %s88
      %s103 = sphi 0, %s89
    $region4: #{apply_nodes.3} parent=1 // loop_header_branch
      %13 = sbr.rel (%p11) target = $region8
    $region5: #{apply_nodes.3} parent=1 // loop_body
      %s15 = ssub.s32 %s10, 1
      %s16 = ssub.s32 %s10, 2
      %s17 = sadd.s32 %s10, 1
      %s18 = ssub.s32 %s10, %s17
      %p19 = scmp.eq.s32.totalorder %s18, 0
      %s21 = sadd.s32 %s20, 1
      %s22 = scalar_select %p19, %s20, %s21
      %p25 = pneg %p19
      %p26 = scmp.eq.s32.totalorder %s10, 3
      %p27 = por %p25, %p26
      %p28 = scmp.ne.s32.totalorder %s20, %s23
      %p29 = scmp.eq.s32.totalorder %s10, 0
      %p30 = por %p28, %p29
      %p31 = scmp.ne.s32.totalorder %s20, %s23
      %p32 = scmp.eq.s32.totalorder %s15, 3
      %p33 = por %p31, %p32
      %p34 = scmp.ne.s32.totalorder %s23, %s24
      %p35 = scmp.eq.s32.totalorder %s15, 0
      %p36 = por %p34, %p35
      %p37 = scmp.ne.s32.totalorder %s23, %s24
      %p38 = scmp.eq.s32.totalorder %s16, 3
      %p39 = por %p37, %p38
      %p41 = scmp.ne.s32.totalorder %s24, %s40
      %p42 = scmp.eq.s32.totalorder %s16, 0
      %p43 = por %p41, %p42
      %s45 = sadd.s32 %s44, 1
      %p48 = scmp.eq.s32.totalorder %s10, 3
      %p49 = scmp.ne.s32.totalorder %s44, %s46
      %p50 = scmp.eq.s32.totalorder %s10, 0
      %p51 = por %p49, %p50
      %p52 = scmp.ne.s32.totalorder %s44, %s46
      %p53 = scmp.eq.s32.totalorder %s15, 3
      %p54 = por %p52, %p53
      %p55 = scmp.ne.s32.totalorder %s46, %s47
      %p56 = scmp.eq.s32.totalorder %s15, 0
      %p57 = por %p55, %p56
      %p58 = scmp.ne.s32.totalorder %s46, %s47
      %p59 = scmp.eq.s32.totalorder %s16, 3
      %p60 = por %p58, %p59
      %p62 = scmp.ne.s32.totalorder %s47, %s61
      %p63 = scmp.eq.s32.totalorder %s16, 0
      %p64 = por %p62, %p63
      %s66 = sadd.s32 %s65, 1
      %p69 = scmp.eq.s32.totalorder %s10, 3
      %p70 = scmp.ne.s32.totalorder %s65, %s67
      %p71 = scmp.eq.s32.totalorder %s10, 0
      %p72 = por %p70, %p71
      %p73 = scmp.ne.s32.totalorder %s65, %s67
      %p74 = scmp.eq.s32.totalorder %s15, 3
      %p75 = por %p73, %p74
      %p76 = scmp.ne.s32.totalorder %s67, %s68
      %p77 = scmp.eq.s32.totalorder %s15, 0
      %p78 = por %p76, %p77
      %p79 = scmp.ne.s32.totalorder %s67, %s68
      %p80 = scmp.eq.s32.totalorder %s16, 3
      %p81 = por %p79, %p80
      %p83 = scmp.ne.s32.totalorder %s68, %s82
      %p84 = scmp.eq.s32.totalorder %s16, 0
      %p85 = por %p83, %p84
      %s87 = sadd.s32 %s86, 1
      %p90 = scmp.eq.s32.totalorder %s10, 3
      %p91 = scmp.ne.s32.totalorder %s86, %s88
      %p92 = scmp.eq.s32.totalorder %s10, 0
      %p93 = por %p91, %p92
      %p94 = scmp.ne.s32.totalorder %s86, %s88
      %p95 = scmp.eq.s32.totalorder %s15, 3
      %p96 = por %p94, %p95
      %p97 = scmp.ne.s32.totalorder %s88, %s89
      %p98 = scmp.eq.s32.totalorder %s15, 0
      %p99 = por %p97, %p98
      %p100 = scmp.ne.s32.totalorder %s88, %s89
      %p101 = scmp.eq.s32.totalorder %s16, 3
      %p102 = por %p100, %p101
      %p104 = scmp.ne.s32.totalorder %s89, %s103
      %p105 = scmp.eq.s32.totalorder %s16, 0
      %p106 = por %p104, %p105
      %p107 = scmp.le.s32.totalorder 1, %s10
      %p108 = scmp.lt.s32.totalorder %s10, 5
      %p109 = pnand %p107, %p108
      %p110 = pneg %p109
      // Predicated region
      $region9: #{apply_nodes.3} parent=5 // pred_check
        _
      $region10: #{apply_nodes.3} parent=5 // pred_check_branch
        %112 = sbr.rel (%p109) target = $region12
      $region11: #{apply_nodes.3} parent=5 // pred_region
        %s113 = ssub.s32 %s10, 1
        // Predicated region
        $region13: #{apply_nodes.3} parent=11 // pred_check
          %p114 = pneg %p57
        $region14: #{apply_nodes.3} parent=11 // pred_check_branch
          %116 = sbr.rel (%p114) target = $region16
        $region15: #{apply_nodes.3} parent=11 // pred_region
          _
        $region16: #{apply_nodes.3} parent=11 // pred_fallthru
          _
      $region12: #{apply_nodes.3} parent=5 // pred_fallthru
        _
      %p117 = scmp.lt.s32.totalorder %s10, 4
      // Predicated region
      $region17: #{apply_nodes.3} parent=5 // pred_check
        %p118 = pneg %p117
      $region18: #{apply_nodes.3} parent=5 // pred_check_branch
        %120 = sbr.rel (%p118) target = $region20
      $region19: #{apply_nodes.3} parent=5 // pred_region
        // Predicated region
        $region21: #{apply_nodes.3} parent=19 // pred_check
          %p121 = pneg %p30
        $region22: #{apply_nodes.3} parent=19 // pred_check_branch
          %123 = sbr.rel (%p121) target = $region24
        $region23: #{apply_nodes.3} parent=19 // pred_region
          %s124 = sand.u32 %s20, 1
          %s125 = sand.u32 %s20, 1
          %s126 = smul.addr %s125, 16
          %s127 = scalar_lea.vmem [#allocation2], %s126
          %s128 = smul.u32 2, %s10
          %s129 = smul.addr %s128, 4
          %s130 = scalar_lea.vmem %s0, %s129
          // Predicated region
          $region25: #{apply_nodes.3} parent=23 // pred_check
            _
          $region26: #{apply_nodes.3} parent=23 // pred_check_branch
            %132 = sbr.rel (0) target = $region28
          $region27: #{apply_nodes.3} parent=23 // pred_region
            // Predicated region
            $region29: #{apply_nodes.3} parent=27 // pred_check
              _
            $region30: #{apply_nodes.3} parent=27 // pred_check_branch
              %134 = sbr.rel (0) target = $region32
            $region31: #{apply_nodes.3} parent=27 // pred_region
              // Predicated region
              $region44: #{apply_nodes.3} parent=31 // pred_check
                _
              $region45: #{apply_nodes.3} parent=31 // pred_check_branch
                %152 = sbr.rel (0) target = $region47
              $region46: #{apply_nodes.3} parent=31 // pred_region
                loop: start=0, step=1, limit=1
                $region48: #{apply_nodes.3} parent=46 // loop_pre_header
                  _
                $region49: #{apply_nodes.3} parent=46 // loop_header
                  %s154 = sphi 0, %s158
                  %p155 = scmp.ge.s32.totalorder %s154, 1
                  %s159 = sphi %s130, %s130
                  %s160 = sphi %s127, %s127
                $region50: #{apply_nodes.3} parent=46 // loop_header_branch
                  %157 = sbr.rel (%p155) target = $region54
                $region51: #{apply_nodes.3} parent=46 // loop_body
                  %v161 = vld [vmem:[%s159] sm:$0xff]
                  %162 = vst [vmem:[%s160] sm:$0xff] %v161
                  %v163 = vld [vmem:[%s159 + $0x20] sm:$0xff]
                  %164 = vst [vmem:[%s160 + $0x8] sm:$0xff] %v163
                $region52: #{apply_nodes.3} parent=46 // loop_footer
                  %s158 = sadd.s32 1, %s154
                $region53: #{apply_nodes.3} parent=46 // loop_footer_branch
                  %153 = sbr.rel target = $region49
                $region54: #{apply_nodes.3} parent=46 // loop_exit
                  _
              $region47: #{apply_nodes.3} parent=31 // pred_fallthru
                _
              // Predicated region
              $region55: #{apply_nodes.3} parent=31 // pred_check
                _
              $region56: #{apply_nodes.3} parent=31 // pred_check_branch
                %166 = sbr.rel target = $region58
              $region57: #{apply_nodes.3} parent=31 // pred_region
                _
              $region58: #{apply_nodes.3} parent=31 // pred_fallthru
                _
            $region32: #{apply_nodes.3} parent=27 // pred_fallthru
              _
            // Predicated region
            $region33: #{apply_nodes.3} parent=27 // pred_check
              _
            $region34: #{apply_nodes.3} parent=27 // pred_check_branch
              %136 = sbr.rel target = $region36
            $region35: #{apply_nodes.3} parent=27 // pred_region
              %s138 = ssub.s32 256, 1
              loop: start=0, step=1, limit=1
              $region37: #{apply_nodes.3} parent=35 // loop_pre_header
                _
              $region38: #{apply_nodes.3} parent=35 // loop_header
                %s140 = sphi 0, %s144
                %p141 = scmp.ge.s32.totalorder %s140, 1
                %s145 = sphi %s130, %s130
                %s146 = sphi %s127, %s127
              $region39: #{apply_nodes.3} parent=35 // loop_header_branch
                %143 = sbr.rel (%p141) target = $region43
              $region40: #{apply_nodes.3} parent=35 // loop_body
                %v147 = vld [vmem:[%s145] sm:%s138]
                %148 = vst [vmem:[%s146] sm:%s138] %v147
                %v149 = vld [vmem:[%s145 + $0x20] sm:%s138]
                %150 = vst [vmem:[%s146 + $0x8] sm:%s138] %v149
              $region41: #{apply_nodes.3} parent=35 // loop_footer
                %s144 = sadd.s32 1, %s140
              $region42: #{apply_nodes.3} parent=35 // loop_footer_branch
                %139 = sbr.rel target = $region38
              $region43: #{apply_nodes.3} parent=35 // loop_exit
                _
            $region36: #{apply_nodes.3} parent=27 // pred_fallthru
              _
          $region28: #{apply_nodes.3} parent=23 // pred_fallthru
            _
          %167 = vnop
        $region24: #{apply_nodes.3} parent=19 // pred_fallthru
          _
      $region20: #{apply_nodes.3} parent=5 // pred_fallthru
        _
      %p168 = scmp.le.s32.totalorder 1, %s10
      %p169 = scmp.lt.s32.totalorder %s10, 5
      %p170 = pnand %p168, %p169
      %p171 = pneg %p170
      // Predicated region
      $region59: #{apply_nodes.3} parent=5 // pred_check
        _
      $region60: #{apply_nodes.3} parent=5 // pred_check_branch
        %173 = sbr.rel (%p170) target = $region62
      $region61: #{apply_nodes.3} parent=5 // pred_region
        %s174 = ssub.s32 %s10, 1
        %s175 = sand.u32 %s23, 1
        %s176 = sand.u32 %s23, 1
        %s177 = smul.addr %s176, 16
        %s178 = scalar_lea.vmem [#allocation2], %s177
        // Predicated region
        $region63: #{apply_nodes.3} parent=61 // pred_check
          %p179 = pneg %p36
        $region64: #{apply_nodes.3} parent=61 // pred_check_branch
          %181 = sbr.rel (%p179) target = $region66
        $region65: #{apply_nodes.3} parent=61 // pred_region
          _
        $region66: #{apply_nodes.3} parent=61 // pred_fallthru
          _
        %s182 = sand.u32 %s23, 1
        %s183 = sand.u32 %s23, 1
        %s184 = smul.addr %s183, 16
        %s185 = scalar_lea.vmem [#allocation2], %s184
        %p186 = pneg %p36
        %p187 = pneg %p33
        %p188 = pneg %p57
        %p189 = pneg %p54
        %p190 = pneg %p78
        %p191 = pneg %p75
        %p192 = pneg %p99
        %p193 = pneg %p96
        %s194 = smul.u32 2, %s15
        %p196 = scmp.eq.s32.totalorder %s15, 0
        // Predicated region
        $region67: #{apply_nodes.3} parent=61 // pred_check
          %p197 = pneg %p196
        $region68: #{apply_nodes.3} parent=61 // pred_check_branch
          %199 = sbr.rel (%p197) target = $region70
        $region69: #{apply_nodes.3} parent=61 // pred_region
          %vm200 = vcmask 7168
          %201 = vst.msk [vmem:[%s2] sm:$0xff] %vm200, 0.0
          %202 = vst.msk [vmem:[%s2 + $0x8] sm:$0xff] %vm200, 0.0
          %203 = vst.msk [vmem:[%s2 + $0x10] sm:$0xff] %vm200, 0.0
          %204 = vst.msk [vmem:[%s2 + $0x18] sm:$0xff] %vm200, 0.0
          %205 = vst.msk [vmem:[%s3] sm:$0xff] %vm200, 0.0
          %206 = vst.msk [vmem:[%s3 + $0x8] sm:$0xff] %vm200, 0.0
          %207 = vst.msk [vmem:[%s3 + $0x10] sm:$0xff] %vm200, 0.0
          %208 = vst.msk [vmem:[%s3 + $0x18] sm:$0xff] %vm200, 0.0
        $region70: #{apply_nodes.3} parent=61 // pred_fallthru
          _
        %v209 = vld [vmem:[%s178] sm:$0xff]
        %v210 = vld [vmem:[%s178 + $0x8] sm:$0xff]
        %v211 = vlaneseq
        %v212 = vand.u32 %v211, 127
        %v213 = vadd.s32 %v212, 128
        %s214 = smul.u32 %s15, 256
        %s215 = ssub.s32 1000, %s214
        %v216 = vstv %s215
        %vm217 = vcmp.lt.s32.totalorder %v212, %v216
        %vm218 = vcmp.lt.s32.totalorder %v213, %v216
        %v219 = vsel %vm217, 1, 0
        %v220 = vsel %vm218, 1, 0
        %vm221 = vcmp.eq.s32.totalorder %v219, 1
        %vm222 = vcmp.eq.s32.totalorder %v220, 1
        %vm223 = vmpackc.low %vm222, %vm221
        %v224 = vsel %vm223, %v209, 0
        %v225 = vsel %vm223, %v210, 0
        %v226 = vld [vmem:[%s1] sm:$0xf]
        %v227 = vld [vmem:[%s1 + $0x4] sm:$0xf]
        %v228 = vld [vmem:[%s1 + $0x8] sm:$0xf]
        %v229 = vld [vmem:[%s1 + $0xc] sm:$0xf]
        %v234 = vunpack.c.l.b16 %v226
        %v235 = vunpack.c.l.b16 %v227
        %v236 = vunpack.c.l.b16 %v228
        %v237 = vunpack.c.l.b16 %v229
        %v238 = vpack.c.b16 %v235, %v234
        %v239 = vpack.c.b16 %v237, %v236
        %v242 = vunpack.c.l.b16 %v224
        %v243 = vunpack.c.h.b16 %v224
        %v244 = vunpack.c.l.b16 %v225
        %v245 = vunpack.c.h.b16 %v225
        %v246 = vpack.c.b16 %v244, %v242
        %v247 = vpack.c.b16 %v245, %v243
        %vm250 = vcmask 130048
        %v252 = vsel %vm250, %v238, 0
        %v255 = vsel %vm250, %v239, 0
        %257 = vmatpush.bf16.msra.mxu0 0
        %258 = vmatpush.bf16.msra.mxu0 0
        %259 = vmatpush.bf16.msra.mxu0 0
        %260 = vmatpush.bf16.msra.mxu0 0
        %261 = vmatpush.bf16.msra.mxu0 0
        %262 = vmatpush.bf16.msra.mxu0 0
        %263 = vmatpush.bf16.msra.mxu0 0
        %264 = vmatpush.bf16.msra.mxu0 %v246
        %265 = vmatmul.bf16.gmra.mxu0 %v252
        %v266 = vpop.f32.mrf.mxu0
        %v267 = vadd.f32 0.0, %v266
        %v268 = vpop.f32.mrf.mxu0
        %v269 = vadd.f32 0.0, %v268
        %270 = vmatmul.bf16.gmra.mxu0 %v255
        %v271 = vpop.f32.mrf.mxu0
        %v272 = vadd.f32 0.0, %v271
        %v273 = vpop.f32.mrf.mxu0
        %v274 = vadd.f32 0.0, %v273
        %275 = vdwg.mxu0
        %276 = vmatpush.bf16.msra.mxu0 0
        %277 = vmatpush.bf16.msra.mxu0 0
        %278 = vmatpush.bf16.msra.mxu0 0
        %279 = vmatpush.bf16.msra.mxu0 0
        %280 = vmatpush.bf16.msra.mxu0 0
        %281 = vmatpush.bf16.msra.mxu0 0
        %282 = vmatpush.bf16.msra.mxu0 0
        %283 = vmatpush.bf16.msra.mxu0 %v247
        %284 = vmatmul.bf16.gmra.mxu0 %v252
        %v285 = vpop.f32.mrf.mxu0
        %v286 = vadd.f32 0.0, %v285
        %v287 = vpop.f32.mrf.mxu0
        %v288 = vadd.f32 0.0, %v287
        %289 = vmatmul.bf16.gmra.mxu0 %v255
        %v290 = vpop.f32.mrf.mxu0
        %v291 = vadd.f32 0.0, %v290
        %v292 = vpop.f32.mrf.mxu0
        %v293 = vadd.f32 0.0, %v292
        %294 = vdwg.mxu0
        %v295 = vld [vmem:[%s2] sm:$0xff]
        %v296 = vld [vmem:[%s2 + $0x8] sm:$0xff]
        %v297 = vld [vmem:[%s2 + $0x10] sm:$0xff]
        %v298 = vld [vmem:[%s2 + $0x18] sm:$0xff]
        %v299 = vadd.f32 %v267, %v286
        %300 = vadd.xlane.f32.xlu0 %v299
        %v301 = vpop.xlane.xlu0 %300
        %v302 = vadd.f32 %v269, %v288
        %303 = vadd.xlane.f32.xlu0 %v302
        %v304 = vpop.xlane.xlu0 %303
        %v305 = vadd.f32 %v272, %v291
        %306 = vadd.xlane.f32.xlu0 %v305
        %v307 = vpop.xlane.xlu0 %306
        %v308 = vadd.f32 %v274, %v293
        %309 = vadd.xlane.f32.xlu0 %v308
        %v310 = vpop.xlane.xlu0 %309
        %v311 = vadd.f32 %v295, %v301
        %v312 = vadd.f32 %v296, %v304
        %v313 = vadd.f32 %v297, %v307
        %v314 = vadd.f32 %v298, %v310
        %vm315 = vcmask 7168
        %316 = vst.msk [vmem:[%s2] sm:$0xff] %vm315, %v311
        %317 = vst.msk [vmem:[%s2 + $0x8] sm:$0xff] %vm315, %v312
        %318 = vst.msk [vmem:[%s2 + $0x10] sm:$0xff] %vm315, %v313
        %319 = vst.msk [vmem:[%s2 + $0x18] sm:$0xff] %vm315, %v314
        %v320 = vld [vmem:[%s3] sm:$0xff]
        %v321 = vld [vmem:[%s3 + $0x8] sm:$0xff]
        %v322 = vld [vmem:[%s3 + $0x10] sm:$0xff]
        %v323 = vld [vmem:[%s3 + $0x18] sm:$0xff]
        %v324 = vmul.f32 %v267, %v267
        %v325 = vmul.f32 %v286, %v286
        %v326 = vmul.f32 %v269, %v269
        %v327 = vmul.f32 %v288, %v288
        %v328 = vmul.f32 %v272, %v272
        %v329 = vmul.f32 %v291, %v291
        %v330 = vmul.f32 %v274, %v274
        %v331 = vmul.f32 %v293, %v293
        %v332 = vadd.f32 %v324, %v325
        %333 = vadd.xlane.f32.xlu0 %v332
        %v334 = vpop.xlane.xlu0 %333
        %v335 = vadd.f32 %v326, %v327
        %336 = vadd.xlane.f32.xlu0 %v335
        %v337 = vpop.xlane.xlu0 %336
        %v338 = vadd.f32 %v328, %v329
        %339 = vadd.xlane.f32.xlu0 %v338
        %v340 = vpop.xlane.xlu0 %339
        %v341 = vadd.f32 %v330, %v331
        %342 = vadd.xlane.f32.xlu0 %v341
        %v343 = vpop.xlane.xlu0 %342
        %v344 = vadd.f32 %v320, %v334
        %v345 = vadd.f32 %v321, %v337
        %v346 = vadd.f32 %v322, %v340
        %v347 = vadd.f32 %v323, %v343
        %348 = vst.msk [vmem:[%s3] sm:$0xff] %vm315, %v344
        %349 = vst.msk [vmem:[%s3 + $0x8] sm:$0xff] %vm315, %v345
        %350 = vst.msk [vmem:[%s3 + $0x10] sm:$0xff] %vm315, %v346
        %351 = vst.msk [vmem:[%s3 + $0x18] sm:$0xff] %vm315, %v347
        // Predicated region
        $region71: #{apply_nodes.3} parent=61 // pred_check
          %p352 = pneg %p75
        $region72: #{apply_nodes.3} parent=61 // pred_check_branch
          %354 = sbr.rel (%p352) target = $region74
        $region73: #{apply_nodes.3} parent=61 // pred_region
          _
        $region74: #{apply_nodes.3} parent=61 // pred_fallthru
          _
        // Predicated region
        $region75: #{apply_nodes.3} parent=61 // pred_check
          %p355 = pneg %p96
        $region76: #{apply_nodes.3} parent=61 // pred_check_branch
          %357 = sbr.rel (%p355) target = $region78
        $region77: #{apply_nodes.3} parent=61 // pred_region
          _
        $region78: #{apply_nodes.3} parent=61 // pred_fallthru
          _
        // Predicated region
        $region79: #{apply_nodes.3} parent=61 // pred_check
          %p358 = pneg %p75
        $region80: #{apply_nodes.3} parent=61 // pred_check_branch
          %360 = sbr.rel (%p358) target = $region82
        $region81: #{apply_nodes.3} parent=61 // pred_region
          _
        $region82: #{apply_nodes.3} parent=61 // pred_fallthru
          _
        // Predicated region
        $region83: #{apply_nodes.3} parent=61 // pred_check
          %p361 = pneg %p96
        $region84: #{apply_nodes.3} parent=61 // pred_check_branch
          %363 = sbr.rel (%p361) target = $region86
        $region85: #{apply_nodes.3} parent=61 // pred_region
          _
        $region86: #{apply_nodes.3} parent=61 // pred_fallthru
          _
      $region62: #{apply_nodes.3} parent=5 // pred_fallthru
        _
      %p364 = scmp.le.s32.totalorder 2, %s10
      // Predicated region
      $region87: #{apply_nodes.3} parent=5 // pred_check
        %p365 = pneg %p364
      $region88: #{apply_nodes.3} parent=5 // pred_check_branch
        %367 = sbr.rel (%p365) target = $region90
      $region89: #{apply_nodes.3} parent=5 // pred_region
        %s368 = ssub.s32 %s10, 2
      $region90: #{apply_nodes.3} parent=5 // pred_fallthru
        _
    $region6: #{apply_nodes.3} parent=1 // loop_footer
      %s14 = sadd.s32 1, %s10
    $region7: #{apply_nodes.3} parent=1 // loop_footer_branch
      %9 = sbr.rel target = $region3
    $region8: #{apply_nodes.3} parent=1 // loop_exit
      _

// kernel: apply_nodes.5
$region0: #{apply_nodes.5}
  #allocation0 [shape = 'u32[]', space=smem, size = 0x4, offset = 0x4, fixed_abs, tag = 'smem constant byte address 0x4 - core index']
  #allocation1 [shape = 'u32[72,128]{1,0:T(1,128)}', space=vmem, size = 0x9000, scoped, tag = 'internal scratch']
  %s0 = inlined_call_operand.vmem [shape: bf16[16,1000], index: 0, kind: input, shape index: {}]
  %s1 = inlined_call_operand.vmem [shape: bf16[32,16], index: 1, kind: input, shape index: {}]
  %s2 = inlined_call_operand.vmem [shape: f32[32,1], index: 2, kind: input, shape index: {}]
  %s3 = inlined_call_operand.vmem [shape: f32[32,1], index: 3, kind: input, shape index: {}]
  %s4 = inlined_call_operand.vmem [shape: bf16[16,32], index: 4, kind: input, shape index: {}]
  %s5 = inlined_call_operand.vmem [shape: f32[16,1], index: 5, kind: input, shape index: {}]
  %s6 = inlined_call_operand.vmem [shape: f32[16,1], index: 6, kind: input, shape index: {}]
  %s7 = inlined_call_operand.hbm [shape: f32[16,1000], index: 7, kind: output, shape index: {}]
  %s8 = sld [smem:[#allocation0]]
  $region99: #{apply_nodes.5} parent=0
    _
  %s10 = ssub.s32 1, %s8
  %s11 = scalar_select 0, %s10, %s8
  $region1: #{apply_nodes.5} parent=0
    #allocation2 [shape = 'u8[16384]{0}', space=vmem, size = 0x4000, scoped, tag = 'input window, operand 0']
    #allocation3 [shape = 'u8[32768]{0}', space=vmem, size = 0x8000, scoped, tag = 'output window, operand 0']
    #allocation4 [shape = 's32[2]{0}', space=sflag, size = 0x8, scoped, tag = 'scoped memory for apply_nodes.5']
    %12 = vsyncpa [#allocation4], 0
    %s13 = scalar_lea.sflag [#allocation4], 1
    %14 = vsyncpa %s13, 0
    loop: start=0, step=1, limit=6
    $region2: #{apply_nodes.5} parent=1 // loop_pre_header
      _
    $region3: #{apply_nodes.5} parent=1 // loop_header
      %s16 = sphi 0, %s20
      %p17 = scmp.ge.s32.totalorder %s16, 6
      %s26 = sphi 0, %s28
      %s29 = sphi 0, %s26
      %s30 = sphi 0, %s29
      %s46 = sphi 0, %s30
      %s50 = sphi 0, %s50
      %s52 = sphi 0, %s50
      %s53 = sphi 0, %s52
      %s67 = sphi 0, %s53
      %s71 = sphi 0, %s71
      %s73 = sphi 0, %s71
      %s74 = sphi 0, %s73
      %s88 = sphi 0, %s74
      %s92 = sphi 0, %s92
      %s94 = sphi 0, %s92
      %s95 = sphi 0, %s94
      %s109 = sphi 0, %s95
      %s113 = sphi 0, %s113
      %s115 = sphi 0, %s113
      %s116 = sphi 0, %s115
      %s130 = sphi 0, %s116
      %s134 = sphi 0, %s134
      %s136 = sphi 0, %s134
      %s137 = sphi 0, %s136
      %s151 = sphi 0, %s137
      %s155 = sphi 0, %s155
      %s157 = sphi 0, %s155
      %s158 = sphi 0, %s157
      %s172 = sphi 0, %s158
      %s178 = sphi 0, %s180
      %s181 = sphi 0, %s178
      %s182 = sphi 0, %s181
      %s198 = sphi 0, %s182
    $region4: #{apply_nodes.5} parent=1 // loop_header_branch
      %19 = sbr.rel (%p17) target = $region8
    $region5: #{apply_nodes.5} parent=1 // loop_body
      %s21 = ssub.s32 %s16, 1
      %s22 = ssub.s32 %s16, 2
      %s23 = sadd.s32 %s16, 1
      %s24 = ssub.s32 %s16, %s23
      %p25 = scmp.eq.s32.totalorder %s24, 0
      %s27 = sadd.s32 %s26, 1
      %s28 = scalar_select %p25, %s26, %s27
      %p31 = pneg %p25
      %p32 = scmp.eq.s32.totalorder %s16, 3
      %p33 = por %p31, %p32
      %p34 = scmp.ne.s32.totalorder %s26, %s29
      %p35 = scmp.eq.s32.totalorder %s16, 0
      %p36 = por %p34, %p35
      %p37 = scmp.ne.s32.totalorder %s26, %s29
      %p38 = scmp.eq.s32.totalorder %s21, 3
      %p39 = por %p37, %p38
      %p40 = scmp.ne.s32.totalorder %s29, %s30
      %p41 = scmp.eq.s32.totalorder %s21, 0
      %p42 = por %p40, %p41
      %p43 = scmp.ne.s32.totalorder %s29, %s30
      %p44 = scmp.eq.s32.totalorder %s22, 3
      %p45 = por %p43, %p44
      %p47 = scmp.ne.s32.totalorder %s30, %s46
      %p48 = scmp.eq.s32.totalorder %s22, 0
      %p49 = por %p47, %p48
      %s51 = sadd.s32 %s50, 1
      %p54 = scmp.eq.s32.totalorder %s16, 3
      %p55 = scmp.ne.s32.totalorder %s50, %s52
      %p56 = scmp.eq.s32.totalorder %s16, 0
      %p57 = por %p55, %p56
      %p58 = scmp.ne.s32.totalorder %s50, %s52
      %p59 = scmp.eq.s32.totalorder %s21, 3
      %p60 = por %p58, %p59
      %p61 = scmp.ne.s32.totalorder %s52, %s53
      %p62 = scmp.eq.s32.totalorder %s21, 0
      %p63 = por %p61, %p62
      %p64 = scmp.ne.s32.totalorder %s52, %s53
      %p65 = scmp.eq.s32.totalorder %s22, 3
      %p66 = por %p64, %p65
      %p68 = scmp.ne.s32.totalorder %s53, %s67
      %p69 = scmp.eq.s32.totalorder %s22, 0
      %p70 = por %p68, %p69
      %s72 = sadd.s32 %s71, 1
      %p75 = scmp.eq.s32.totalorder %s16, 3
      %p76 = scmp.ne.s32.totalorder %s71, %s73
      %p77 = scmp.eq.s32.totalorder %s16, 0
      %p78 = por %p76, %p77
      %p79 = scmp.ne.s32.totalorder %s71, %s73
      %p80 = scmp.eq.s32.totalorder %s21, 3
      %p81 = por %p79, %p80
      %p82 = scmp.ne.s32.totalorder %s73, %s74
      %p83 = scmp.eq.s32.totalorder %s21, 0
      %p84 = por %p82, %p83
      %p85 = scmp.ne.s32.totalorder %s73, %s74
      %p86 = scmp.eq.s32.totalorder %s22, 3
      %p87 = por %p85, %p86
      %p89 = scmp.ne.s32.totalorder %s74, %s88
      %p90 = scmp.eq.s32.totalorder %s22, 0
      %p91 = por %p89, %p90
      %s93 = sadd.s32 %s92, 1
      %p96 = scmp.eq.s32.totalorder %s16, 3
      %p97 = scmp.ne.s32.totalorder %s92, %s94
      %p98 = scmp.eq.s32.totalorder %s16, 0
      %p99 = por %p97, %p98
      %p100 = scmp.ne.s32.totalorder %s92, %s94
      %p101 = scmp.eq.s32.totalorder %s21, 3
      %p102 = por %p100, %p101
      %p103 = scmp.ne.s32.totalorder %s94, %s95
      %p104 = scmp.eq.s32.totalorder %s21, 0
      %p105 = por %p103, %p104
      %p106 = scmp.ne.s32.totalorder %s94, %s95
      %p107 = scmp.eq.s32.totalorder %s22, 3
      %p108 = por %p106, %p107
      %p110 = scmp.ne.s32.totalorder %s95, %s109
      %p111 = scmp.eq.s32.totalorder %s22, 0
      %p112 = por %p110, %p111
      %s114 = sadd.s32 %s113, 1
      %p117 = scmp.eq.s32.totalorder %s16, 3
      %p118 = scmp.ne.s32.totalorder %s113, %s115
      %p119 = scmp.eq.s32.totalorder %s16, 0
      %p120 = por %p118, %p119
      %p121 = scmp.ne.s32.totalorder %s113, %s115
      %p122 = scmp.eq.s32.totalorder %s21, 3
      %p123 = por %p121, %p122
      %p124 = scmp.ne.s32.totalorder %s115, %s116
      %p125 = scmp.eq.s32.totalorder %s21, 0
      %p126 = por %p124, %p125
      %p127 = scmp.ne.s32.totalorder %s115, %s116
      %p128 = scmp.eq.s32.totalorder %s22, 3
      %p129 = por %p127, %p128
      %p131 = scmp.ne.s32.totalorder %s116, %s130
      %p132 = scmp.eq.s32.totalorder %s22, 0
      %p133 = por %p131, %p132
      %s135 = sadd.s32 %s134, 1
      %p138 = scmp.eq.s32.totalorder %s16, 3
      %p139 = scmp.ne.s32.totalorder %s134, %s136
      %p140 = scmp.eq.s32.totalorder %s16, 0
      %p141 = por %p139, %p140
      %p142 = scmp.ne.s32.totalorder %s134, %s136
      %p143 = scmp.eq.s32.totalorder %s21, 3
      %p144 = por %p142, %p143
      %p145 = scmp.ne.s32.totalorder %s136, %s137
      %p146 = scmp.eq.s32.totalorder %s21, 0
      %p147 = por %p145, %p146
      %p148 = scmp.ne.s32.totalorder %s136, %s137
      %p149 = scmp.eq.s32.totalorder %s22, 3
      %p150 = por %p148, %p149
      %p152 = scmp.ne.s32.totalorder %s137, %s151
      %p153 = scmp.eq.s32.totalorder %s22, 0
      %p154 = por %p152, %p153
      %s156 = sadd.s32 %s155, 1
      %p159 = scmp.eq.s32.totalorder %s16, 3
      %p160 = scmp.ne.s32.totalorder %s155, %s157
      %p161 = scmp.eq.s32.totalorder %s16, 0
      %p162 = por %p160, %p161
      %p163 = scmp.ne.s32.totalorder %s155, %s157
      %p164 = scmp.eq.s32.totalorder %s21, 3
      %p165 = por %p163, %p164
      %p166 = scmp.ne.s32.totalorder %s157, %s158
      %p167 = scmp.eq.s32.totalorder %s21, 0
      %p168 = por %p166, %p167
      %p169 = scmp.ne.s32.totalorder %s157, %s158
      %p170 = scmp.eq.s32.totalorder %s22, 3
      %p171 = por %p169, %p170
      %p173 = scmp.ne.s32.totalorder %s158, %s172
      %p174 = scmp.eq.s32.totalorder %s22, 0
      %p175 = por %p173, %p174
      %s176 = ssub.s32 %s16, %s23
      %p177 = scmp.eq.s32.totalorder %s176, 0
      %s179 = sadd.s32 %s178, 1
      %s180 = scalar_select %p177, %s178, %s179
      %p183 = pneg %p177
      %p184 = scmp.eq.s32.totalorder %s16, 3
      %p185 = por %p183, %p184
      %p186 = scmp.ne.s32.totalorder %s178, %s181
      %p187 = scmp.eq.s32.totalorder %s16, 0
      %p188 = por %p186, %p187
      %p189 = scmp.ne.s32.totalorder %s178, %s181
      %p190 = scmp.eq.s32.totalorder %s21, 3
      %p191 = por %p189, %p190
      %p192 = scmp.ne.s32.totalorder %s181, %s182
      %p193 = scmp.eq.s32.totalorder %s21, 0
      %p194 = por %p192, %p193
      %p195 = scmp.ne.s32.totalorder %s181, %s182
      %p196 = scmp.eq.s32.totalorder %s22, 3
      %p197 = por %p195, %p196
      %p199 = scmp.ne.s32.totalorder %s182, %s198
      %p200 = scmp.eq.s32.totalorder %s22, 0
      %p201 = por %p199, %p200
      %p202 = scmp.le.s32.totalorder 1, %s16
      %p203 = scmp.lt.s32.totalorder %s16, 5
      %p204 = pnand %p202, %p203
      %p205 = pneg %p204
      // Predicated region
      $region9: #{apply_nodes.5} parent=5 // pred_check
        _
      $region10: #{apply_nodes.5} parent=5 // pred_check_branch
        %207 = sbr.rel (%p204) target = $region12
      $region11: #{apply_nodes.5} parent=5 // pred_region
        %s208 = ssub.s32 %s16, 1
        // Predicated region
        $region13: #{apply_nodes.5} parent=11 // pred_check
          %p209 = pneg %p63
        $region14: #{apply_nodes.5} parent=11 // pred_check_branch
          %211 = sbr.rel (%p209) target = $region16
        $region15: #{apply_nodes.5} parent=11 // pred_region
          _
        $region16: #{apply_nodes.5} parent=11 // pred_fallthru
          _
        // Predicated region
        $region17: #{apply_nodes.5} parent=11 // pred_check
          %p212 = pneg %p84
        $region18: #{apply_nodes.5} parent=11 // pred_check_branch
          %214 = sbr.rel (%p212) target = $region20
        $region19: #{apply_nodes.5} parent=11 // pred_region
          _
        $region20: #{apply_nodes.5} parent=11 // pred_fallthru
          _
        // Predicated region
        $region21: #{apply_nodes.5} parent=11 // pred_check
          %p215 = pneg %p105
        $region22: #{apply_nodes.5} parent=11 // pred_check_branch
          %217 = sbr.rel (%p215) target = $region24
        $region23: #{apply_nodes.5} parent=11 // pred_region
          _
        $region24: #{apply_nodes.5} parent=11 // pred_fallthru
          _
        // Predicated region
        $region25: #{apply_nodes.5} parent=11 // pred_check
          %p218 = pneg %p126
        $region26: #{apply_nodes.5} parent=11 // pred_check_branch
          %220 = sbr.rel (%p218) target = $region28
        $region27: #{apply_nodes.5} parent=11 // pred_region
          _
        $region28: #{apply_nodes.5} parent=11 // pred_fallthru
          _
        // Predicated region
        $region29: #{apply_nodes.5} parent=11 // pred_check
          %p221 = pneg %p147
        $region30: #{apply_nodes.5} parent=11 // pred_check_branch
          %223 = sbr.rel (%p221) target = $region32
        $region31: #{apply_nodes.5} parent=11 // pred_region
          _
        $region32: #{apply_nodes.5} parent=11 // pred_fallthru
          _
        // Predicated region
        $region33: #{apply_nodes.5} parent=11 // pred_check
          %p224 = pneg %p168
        $region34: #{apply_nodes.5} parent=11 // pred_check_branch
          %226 = sbr.rel (%p224) target = $region36
        $region35: #{apply_nodes.5} parent=11 // pred_region
          _
        $region36: #{apply_nodes.5} parent=11 // pred_fallthru
          _
      $region12: #{apply_nodes.5} parent=5 // pred_fallthru
        _
      %p227 = scmp.lt.s32.totalorder %s16, 4
      // Predicated region
      $region37: #{apply_nodes.5} parent=5 // pred_check
        %p228 = pneg %p227
      $region38: #{apply_nodes.5} parent=5 // pred_check_branch
        %230 = sbr.rel (%p228) target = $region40
      $region39: #{apply_nodes.5} parent=5 // pred_region
        // Predicated region
        $region41: #{apply_nodes.5} parent=39 // pred_check
          %p231 = pneg %p36
        $region42: #{apply_nodes.5} parent=39 // pred_check_branch
          %233 = sbr.rel (%p231) target = $region44
        $region43: #{apply_nodes.5} parent=39 // pred_region
          %s234 = sand.u32 %s26, 1
          %s235 = sand.u32 %s26, 1
          %s236 = smul.addr %s235, 16
          %s237 = scalar_lea.vmem [#allocation2], %s236
          %s238 = smul.u32 2, %s16
          %s239 = smul.addr %s238, 4
          %s240 = scalar_lea.vmem %s0, %s239
          // Predicated region
          $region45: #{apply_nodes.5} parent=43 // pred_check
            _
          $region46: #{apply_nodes.5} parent=43 // pred_check_branch
            %242 = sbr.rel (0) target = $region48
          $region47: #{apply_nodes.5} parent=43 // pred_region
            // Predicated region
            $region49: #{apply_nodes.5} parent=47 // pred_check
              _
            $region50: #{apply_nodes.5} parent=47 // pred_check_branch
              %244 = sbr.rel (0) target = $region52
            $region51: #{apply_nodes.5} parent=47 // pred_region
              // Predicated region
              $region64: #{apply_nodes.5} parent=51 // pred_check
                _
              $region65: #{apply_nodes.5} parent=51 // pred_check_branch
                %262 = sbr.rel (0) target = $region67
              $region66: #{apply_nodes.5} parent=51 // pred_region
                loop: start=0, step=1, limit=1
                $region68: #{apply_nodes.5} parent=66 // loop_pre_header
                  _
                $region69: #{apply_nodes.5} parent=66 // loop_header
                  %s264 = sphi 0, %s268
                  %p265 = scmp.ge.s32.totalorder %s264, 1
                  %s269 = sphi %s240, %s240
                  %s270 = sphi %s237, %s237
                $region70: #{apply_nodes.5} parent=66 // loop_header_branch
                  %267 = sbr.rel (%p265) target = $region74
                $region71: #{apply_nodes.5} parent=66 // loop_body
                  %v271 = vld [vmem:[%s269] sm:$0xff]
                  %272 = vst [vmem:[%s270] sm:$0xff] %v271
                  %v273 = vld [vmem:[%s269 + $0x20] sm:$0xff]
                  %274 = vst [vmem:[%s270 + $0x8] sm:$0xff] %v273
                $region72: #{apply_nodes.5} parent=66 // loop_footer
                  %s268 = sadd.s32 1, %s264
                $region73: #{apply_nodes.5} parent=66 // loop_footer_branch
                  %263 = sbr.rel target = $region69
                $region74: #{apply_nodes.5} parent=66 // loop_exit
                  _
              $region67: #{apply_nodes.5} parent=51 // pred_fallthru
                _
              // Predicated region
              $region75: #{apply_nodes.5} parent=51 // pred_check
                _
              $region76: #{apply_nodes.5} parent=51 // pred_check_branch
                %276 = sbr.rel target = $region78
              $region77: #{apply_nodes.5} parent=51 // pred_region
                _
              $region78: #{apply_nodes.5} parent=51 // pred_fallthru
                _
            $region52: #{apply_nodes.5} parent=47 // pred_fallthru
              _
            // Predicated region
            $region53: #{apply_nodes.5} parent=47 // pred_check
              _
            $region54: #{apply_nodes.5} parent=47 // pred_check_branch
              %246 = sbr.rel target = $region56
            $region55: #{apply_nodes.5} parent=47 // pred_region
              %s248 = ssub.s32 256, 1
              loop: start=0, step=1, limit=1
              $region57: #{apply_nodes.5} parent=55 // loop_pre_header
                _
              $region58: #{apply_nodes.5} parent=55 // loop_header
                %s250 = sphi 0, %s254
                %p251 = scmp.ge.s32.totalorder %s250, 1
                %s255 = sphi %s240, %s240
                %s256 = sphi %s237, %s237
              $region59: #{apply_nodes.5} parent=55 // loop_header_branch
                %253 = sbr.rel (%p251) target = $region63
              $region60: #{apply_nodes.5} parent=55 // loop_body
                %v257 = vld [vmem:[%s255] sm:%s248]
                %258 = vst [vmem:[%s256] sm:%s248] %v257
                %v259 = vld [vmem:[%s255 + $0x20] sm:%s248]
                %260 = vst [vmem:[%s256 + $0x8] sm:%s248] %v259
              $region61: #{apply_nodes.5} parent=55 // loop_footer
                %s254 = sadd.s32 1, %s250
              $region62: #{apply_nodes.5} parent=55 // loop_footer_branch
                %249 = sbr.rel target = $region58
              $region63: #{apply_nodes.5} parent=55 // loop_exit
                _
            $region56: #{apply_nodes.5} parent=47 // pred_fallthru
              _
          $region48: #{apply_nodes.5} parent=43 // pred_fallthru
            _
          %277 = vnop
        $region44: #{apply_nodes.5} parent=39 // pred_fallthru
          _
      $region40: #{apply_nodes.5} parent=5 // pred_fallthru
        _
      %p278 = scmp.le.s32.totalorder 1, %s16
      %p279 = scmp.lt.s32.totalorder %s16, 5
      %p280 = pnand %p278, %p279
      %p281 = pneg %p280
      // Predicated region
      $region79: #{apply_nodes.5} parent=5 // pred_check
        _
      $region80: #{apply_nodes.5} parent=5 // pred_check_branch
        %283 = sbr.rel (%p280) target = $region82
      $region81: #{apply_nodes.5} parent=5 // pred_region
        %s284 = ssub.s32 %s16, 1
        %s285 = sand.u32 %s29, 1
        %s286 = sand.u32 %s29, 1
        %s287 = smul.addr %s286, 16
        %s288 = scalar_lea.vmem [#allocation2], %s287
        // Predicated region
        $region83: #{apply_nodes.5} parent=81 // pred_check
          %p289 = pneg %p42
        $region84: #{apply_nodes.5} parent=81 // pred_check_branch
          %291 = sbr.rel (%p289) target = $region86
        $region85: #{apply_nodes.5} parent=81 // pred_region
          _
        $region86: #{apply_nodes.5} parent=81 // pred_fallthru
          _
        %s292 = sand.u32 %s29, 1
        %s293 = sand.u32 %s29, 1
        %s294 = smul.addr %s293, 16
        %s295 = scalar_lea.vmem [#allocation2], %s294
        %p296 = pneg %p42
        %p297 = pneg %p39
        %p298 = pneg %p63
        %p299 = pneg %p60
        %p300 = pneg %p84
        %p301 = pneg %p81
        %p302 = pneg %p105
        %p303 = pneg %p102
        %p304 = pneg %p126
        %p305 = pneg %p123
        %p306 = pneg %p147
        %p307 = pneg %p144
        %p308 = pneg %p168
        %p309 = pneg %p165
        %p310 = pneg %p194
        %p311 = pneg %p191
        %s312 = sand.u32 %s181, 1
        %s313 = scalar_lea.sflag [#allocation4], %s312
        %s314 = sand.u32 %s181, 1
        %s315 = smul.addr %s314, 32
        %s316 = scalar_lea.vmem [#allocation3], %s315
        %s317 = smul.u32 2, %s21
        %s318 = smul.u32 2, %s21
        %v320 = vld [vmem:[%s1] sm:$0xf]
        %v321 = vld [vmem:[%s1 + $0x4] sm:$0xf]
        %v322 = vld [vmem:[%s1 + $0x8] sm:$0xf]
        %v323 = vld [vmem:[%s1 + $0xc] sm:$0xf]
        %v324 = vld [vmem:[%s288] sm:$0xff]
        %v325 = vld [vmem:[%s288 + $0x8] sm:$0xff]
        %v330 = vunpack.c.l.b16 %v320
        %v331 = vunpack.c.l.b16 %v321
        %v332 = vunpack.c.l.b16 %v322
        %v333 = vunpack.c.l.b16 %v323
        %v334 = vpack.c.b16 %v331, %v330
        %v335 = vpack.c.b16 %v333, %v332
        %v338 = vunpack.c.l.b16 %v324
        %v339 = vunpack.c.h.b16 %v324
        %v340 = vunpack.c.l.b16 %v325
        %v341 = vunpack.c.h.b16 %v325
        %v342 = vpack.c.b16 %v340, %v338
        %v343 = vpack.c.b16 %v341, %v339
        %vm346 = vcmask 130048
        %v348 = vsel %vm346, %v334, 0
        %v351 = vsel %vm346, %v335, 0
        %353 = vmatpush.bf16.msra.mxu0 0
        %354 = vmatpush.bf16.msra.mxu0 0
        %355 = vmatpush.bf16.msra.mxu0 0
        %356 = vmatpush.bf16.msra.mxu0 0
        %357 = vmatpush.bf16.msra.mxu0 0
        %358 = vmatpush.bf16.msra.mxu0 0
        %359 = vmatpush.bf16.msra.mxu0 0
        %360 = vmatpush.bf16.msra.mxu0 %v342
        %361 = vmatmul.bf16.gmra.mxu0 %v348
        %v362 = vpop.f32.mrf.mxu0
        %v363 = vadd.f32 0.0, %v362
        %v364 = vpop.f32.mrf.mxu0
        %v365 = vadd.f32 0.0, %v364
        %366 = vmatmul.bf16.gmra.mxu0 %v351
        %v367 = vpop.f32.mrf.mxu0
        %v368 = vadd.f32 0.0, %v367
        %v369 = vpop.f32.mrf.mxu0
        %v370 = vadd.f32 0.0, %v369
        %371 = vdwg.mxu0
        %372 = vmatpush.bf16.msra.mxu0 0
        %373 = vmatpush.bf16.msra.mxu0 0
        %374 = vmatpush.bf16.msra.mxu0 0
        %375 = vmatpush.bf16.msra.mxu0 0
        %376 = vmatpush.bf16.msra.mxu0 0
        %377 = vmatpush.bf16.msra.mxu0 0
        %378 = vmatpush.bf16.msra.mxu0 0
        %379 = vmatpush.bf16.msra.mxu0 %v343
        %380 = vmatmul.bf16.gmra.mxu0 %v348
        %v381 = vpop.f32.mrf.mxu0
        %v382 = vadd.f32 0.0, %v381
        %v383 = vpop.f32.mrf.mxu0
        %v384 = vadd.f32 0.0, %v383
        %385 = vmatmul.bf16.gmra.mxu0 %v351
        %v386 = vpop.f32.mrf.mxu0
        %v387 = vadd.f32 0.0, %v386
        %v388 = vpop.f32.mrf.mxu0
        %v389 = vadd.f32 0.0, %v388
        %390 = vdwg.mxu0
        %v391 = vld [vmem:[%s2] sm:$0xff]
        %v392 = vld [vmem:[%s2 + $0x8] sm:$0xff]
        %v393 = vld [vmem:[%s2 + $0x10] sm:$0xff]
        %v394 = vld [vmem:[%s2 + $0x18] sm:$0xff]
        %396 = vset.pattern.permute.xlu0 0
        %397 = vperm.xlu0 %396, %v391
        %v398 = vpop.permute.xlu0 %397
        %401 = vset.pattern.permute.xlu0 0
        %402 = vperm.xlu0 %401, %v392
        %v403 = vpop.permute.xlu0 %402
        %406 = vset.pattern.permute.xlu0 0
        %407 = vperm.xlu0 %406, %v393
        %v408 = vpop.permute.xlu0 %407
        %411 = vset.pattern.permute.xlu0 0
        %412 = vperm.xlu0 %411, %v394
        %v413 = vpop.permute.xlu0 %412
        %v415 = vmul.f32 %v363, %v398
        %v416 = vmul.f32 %v382, %v398
        %v417 = vmul.f32 %v365, %v403
        %v418 = vmul.f32 %v384, %v403
        %v419 = vmul.f32 %v368, %v408
        %v420 = vmul.f32 %v387, %v408
        %v421 = vmul.f32 %v370, %v413
        %v422 = vmul.f32 %v389, %v413
        %v423 = vld [vmem:[%s3] sm:$0xff]
        %v424 = vld [vmem:[%s3 + $0x8] sm:$0xff]
        %v425 = vld [vmem:[%s3 + $0x10] sm:$0xff]
        %v426 = vld [vmem:[%s3 + $0x18] sm:$0xff]
        %428 = vset.pattern.permute.xlu0 0
        %429 = vperm.xlu0 %428, %v423
        %v430 = vpop.permute.xlu0 %429
        %433 = vset.pattern.permute.xlu0 0
        %434 = vperm.xlu0 %433, %v424
        %v435 = vpop.permute.xlu0 %434
        %438 = vset.pattern.permute.xlu0 0
        %439 = vperm.xlu0 %438, %v425
        %v440 = vpop.permute.xlu0 %439
        %443 = vset.pattern.permute.xlu0 0
        %444 = vperm.xlu0 %443, %v426
        %v445 = vpop.permute.xlu0 %444
        %v447 = vadd.f32 %v415, %v430
        %v448 = vadd.f32 %v416, %v430
        %v449 = vadd.f32 %v417, %v435
        %v450 = vadd.f32 %v418, %v435
        %v451 = vadd.f32 %v419, %v440
        %v452 = vadd.f32 %v420, %v440
        %v453 = vadd.f32 %v421, %v445
        %v454 = vadd.f32 %v422, %v445
        %v455 = vmax.f32 %v447, 0.0
        %v456 = vmax.f32 %v448, 0.0
        %v457 = vmax.f32 %v449, 0.0
        %v458 = vmax.f32 %v450, 0.0
        %v459 = vmax.f32 %v451, 0.0
        %v460 = vmax.f32 %v452, 0.0
        %v461 = vmax.f32 %v453, 0.0
        %v462 = vmax.f32 %v454, 0.0
        %v463 = vld [vmem:[%s4] sm:$0xf]
        %v464 = vld [vmem:[%s4 + $0x4] sm:$0xf]
        %v465 = vpack.c.bf16 %v457, %v455
        %v466 = vpack.c.bf16 %v458, %v456
        %v467 = vpack.c.bf16 %v461, %v459
        %v468 = vpack.c.bf16 %v462, %v460
        %v471 = vunpack.c.l.b16 %v463
        %v472 = vunpack.c.l.b16 %v464
        %v473 = vpack.c.b16 %v472, %v471
        %vm474 = vcmask 261120
        %v476 = vsel %vm474, %v473, 0
        %478 = vmatpush.bf16.msra.mxu0 0
        %479 = vmatpush.bf16.msra.mxu0 0
        %480 = vmatpush.bf16.msra.mxu0 0
        %481 = vmatpush.bf16.msra.mxu0 0
        %482 = vmatpush.bf16.msra.mxu0 0
        %483 = vmatpush.bf16.msra.mxu0 0
        %484 = vmatpush.bf16.msra.mxu0 %v467
        %485 = vmatpush.bf16.msra.mxu0 %v465
        %486 = vmatmul.bf16.gmra.mxu0 %v476
        %v487 = vpop.f32.mrf.mxu0
        %v488 = vadd.f32 0.0, %v487
        %v489 = vpop.f32.mrf.mxu0
        %v490 = vadd.f32 0.0, %v489
        %491 = vdwg.mxu0
        %492 = vmatpush.bf16.msra.mxu0 0
        %493 = vmatpush.bf16.msra.mxu0 0
        %494 = vmatpush.bf16.msra.mxu0 0
        %495 = vmatpush.bf16.msra.mxu0 0
        %496 = vmatpush.bf16.msra.mxu0 0
        %497 = vmatpush.bf16.msra.mxu0 0
        %498 = vmatpush.bf16.msra.mxu0 %v468
        %499 = vmatpush.bf16.msra.mxu0 %v466
        %500 = vmatmul.bf16.gmra.mxu0 %v476
        %v501 = vpop.f32.mrf.mxu0
        %v502 = vadd.f32 0.0, %v501
        %v503 = vpop.f32.mrf.mxu0
        %v504 = vadd.f32 0.0, %v503
        %505 = vdwg.mxu0
        %v506 = vld [vmem:[%s5] sm:$0xff]
        %v507 = vld [vmem:[%s5 + $0x8] sm:$0xff]
        %509 = vset.pattern.permute.xlu0 0
        %510 = vperm.xlu0 %509, %v506
        %v511 = vpop.permute.xlu0 %510
        %514 = vset.pattern.permute.xlu0 0
        %515 = vperm.xlu0 %514, %v507
        %v516 = vpop.permute.xlu0 %515
        %v518 = vmul.f32 %v488, %v511
        %v519 = vmul.f32 %v502, %v511
        %v520 = vmul.f32 %v490, %v516
        %v521 = vmul.f32 %v504, %v516
        %v522 = vld [vmem:[%s6] sm:$0xff]
        %v523 = vld [vmem:[%s6 + $0x8] sm:$0xff]
        %525 = vset.pattern.permute.xlu0 0
        %526 = vperm.xlu0 %525, %v522
        %v527 = vpop.permute.xlu0 %526
        %530 = vset.pattern.permute.xlu0 0
        %531 = vperm.xlu0 %530, %v523
        %v532 = vpop.permute.xlu0 %531
        %v534 = vadd.f32 %v518, %v527
        %v535 = vadd.f32 %v519, %v527
        %v536 = vadd.f32 %v520, %v532
        %v537 = vadd.f32 %v521, %v532
        %v538 = vmax.f32 %v534, 0.0
        %v539 = vmax.f32 %v535, 0.0
        %v540 = vmax.f32 %v536, 0.0
        %v541 = vmax.f32 %v537, 0.0
        %542 = vst [vmem:[%s316] sm:$0xff] %v538
        %543 = vst [vmem:[%s316 + $0x8] sm:$0xff] %v539
        %544 = vst [vmem:[%s316 + $0x10] sm:$0xff] %v540
        %545 = vst [vmem:[%s316 + $0x18] sm:$0xff] %v541
        %s546 = sand.u32 %s181, 1
        %s547 = scalar_lea.sflag [#allocation4], %s546
        %s548 = sand.u32 %s181, 1
        %s549 = smul.addr %s548, 32
        %s550 = scalar_lea.vmem [#allocation3], %s549
        // Predicated region
        $region87: #{apply_nodes.5} parent=81 // pred_check
          %p551 = pneg %p191
        $region88: #{apply_nodes.5} parent=81 // pred_check_branch
          %553 = sbr.rel (%p551) target = $region90
        $region89: #{apply_nodes.5} parent=81 // pred_region
          %s554 = smul.u32 2, %s21
          %556 = vsyncadd %s547, 0
          %s557 = smul.addr %s554, 8
          %s558 = scalar_lea.hbm %s7, %s557
          %s559 = sshll.u32 %s550, 4
          %s560 = int_to_ptr.vmem [resolvable:$true] %s559
          %s561 = sshll.u32 %s558, 4
          %s562 = int_to_ptr.hbm [resolvable:$true] %s561
          %567 = dma.vmem_to_hbm [thread:$0]  %s560, 512, %s562, %s547, 256, 1024, 16
        $region90: #{apply_nodes.5} parent=81 // pred_fallthru
          _
      $region82: #{apply_nodes.5} parent=5 // pred_fallthru
        _
      %p568 = scmp.le.s32.totalorder 2, %s16
      // Predicated region
      $region91: #{apply_nodes.5} parent=5 // pred_check
        %p569 = pneg %p568
      $region92: #{apply_nodes.5} parent=5 // pred_check_branch
        %571 = sbr.rel (%p569) target = $region94
      $region93: #{apply_nodes.5} parent=5 // pred_region
        %s572 = ssub.s32 %s16, 2
        // Predicated region
        $region95: #{apply_nodes.5} parent=93 // pred_check
          %p573 = pneg %p197
        $region96: #{apply_nodes.5} parent=93 // pred_check_branch
          %575 = sbr.rel (%p573) target = $region98
        $region97: #{apply_nodes.5} parent=93 // pred_region
          %s576 = sand.u32 %s182, 1
          %s577 = scalar_lea.sflag [#allocation4], %s576
          %s578 = sand.u32 %s182, 1
          %s579 = smul.addr %s578, 32
          %s580 = scalar_lea.vmem [#allocation3], %s579
          %582 = dma.done %s577, 512
        $region98: #{apply_nodes.5} parent=93 // pred_fallthru
          _
      $region94: #{apply_nodes.5} parent=5 // pred_fallthru
        _
    $region6: #{apply_nodes.5} parent=1 // loop_footer
      %s20 = sadd.s32 1, %s16
    $region7: #{apply_nodes.5} parent=1 // loop_footer_branch
      %15 = sbr.rel target = $region3
    $region8: #{apply_nodes.5} parent=1 // loop_exit
      _
    %583 = vsyncpa [#allocation4], 1
    %s584 = scalar_lea.sflag [#allocation4], 1
    %585 = vsyncpa %s584, 1

</llo_original>
